<compile_context>
chip_gen: v5e
topology: v5e:2x2
jax: 0.10.0
libtpu: 0.0.40
codegen_flags: <defaults>
</compile_context>

<pallas_src>
import math

import jax
import jax.numpy as jnp
from jax.experimental import pallas as pl
from jax.experimental.pallas import tpu as pltpu


def _round_up(x, m):
    return (x + m - 1) // m * m


def _permute_gates(w, H):
    """Reorder the 4H gate columns from PyTorch (i, f, g, o) to (i, f, o, g)."""
    return jnp.concatenate(
        [w[..., :2 * H], w[..., 3 * H:4 * H], w[..., 2 * H:3 * H]], axis=-1)


def _pick_tt(T, BT, H, O_pad, budget_bytes):
    """Largest divisor of T whose per-block VMEM estimate fits the budget."""
    best = 1
    for tt in range(1, T + 1):
        if T % tt:
            continue
        rows = tt * BT
        est = (2 * rows * 4 * H * 4        # gx f32 input block, double-buffered
               + 2 * rows * O_pad * 2      # y bf16 output block, double-buffered
               + rows * H * 2              # hseq bf16 scratch
               + 2 * 2 * (H * 4 * H + H * O_pad)  # bf16 weights (double-buffered)
               + 8 * BT * H * 4)           # h/c scratch + h0/c0 blocks (f32)
        if est <= budget_bytes:
            best = tt
    return best


def sxlstm_kernel(gx_ref, whh_ref, wout_ref, bout_ref, len_ref, h0_ref, c0_ref,
                  y_ref, h_scr, c_scr, hseq_scr):
    """Grid = (batch-tile ['parallel'], time-block ['arbitrary']).

    gx_ref   : (TT*BT, 4H) f32   precomputed x @ W_ih^T + b (gate order i,f,o,g)
    whh_ref  : (H, 4H)    bf16   recurrent weights (gate order i,f,o,g)
    wout_ref : (H, O_pad) bf16   head weights (lane-padded)
    y_ref    : (TT*BT, O_pad) bf16 lane-dense head output
    h/c scratch persist across time-blocks of one batch tile.
    """
    n = pl.program_id(1)                     # time-block index (serial axis)
    BT, H = h_scr.shape
    H3 = 3 * H
    TT = hseq_scr.shape[0] // BT

    @pl.when(n == 0)
    def _init():
        h_scr[...] = h0_ref[...]
        c_scr[...] = c0_ref[...]

    whh = whh_ref[...]                       # loaded once, outside the loop
    lengths = len_ref[...]                   # (BT, 1) int32
    t_base = n * TT

    # ---- recurrence: only h @ W_hh^T + gate math per step. bf16 MXU operands,
    # f32 accumulation and f32 VPU/EUP elementwise (v5e-safe).
    # TODO(synk): at real H, hold W_hh resident via pltpu.matmul_push_rhs /
    # matmul_acc_lhs (and accumulate gx in the MRB on v7x) to shorten the
    # serial per-step MXU chain.
    def step(s, carry):
        row = pl.multiple_of(s * BT, BT)
        h_prev = h_scr[...]
        c_prev = c_scr[...]
        gates = gx_ref[pl.ds(row, BT), :] + jnp.dot(
            h_prev.astype(jnp.bfloat16), whh, preferred_element_type=jnp.float32)
        # permuted gate order (i, f, o, g): one sigmoid pass over 3H lanes,
        # one tanh pass over H lanes -- no redundant full-4H transcendentals.
        sig = jax.nn.sigmoid(gates[:, :H3])
        g_g = jnp.tanh(gates[:, H3:])
        i_g = sig[:, 0:H]
        f_g = sig[:, H:2 * H]
        o_g = sig[:, 2 * H:H3]
        c_new = f_g * c_prev + i_g * g_g
        h_new = o_g * jnp.tanh(c_new)
        # packed-sequence mask: one broadcast per step, reused for h, c, hseq
        mb = jnp.broadcast_to(
            (lengths > (t_base + s)).astype(jnp.float32), (BT, H))
        h_cur = h_prev + mb * (h_new - h_prev)
        c_cur = c_prev + mb * (c_new - c_prev)
        # TODO(synk): on v5e, fuse h/c into one (BT, 2H) scratch so these two
        # narrow stores share one wider vst.
        h_scr[...] = h_cur
        c_scr[...] = c_cur
        # pad_packed_sequence zero-fills beyond each length; bf16 dead-end store
        hseq_scr[pl.ds(row, BT), :] = (mb * h_cur).astype(jnp.bfloat16)
        return carry

    jax.lax.fori_loop(0, TT, step, 0, unroll=min(TT, 8))

    # ---- hoisted Linear head: one (TT*BT, H) @ (H, 128) matmul with a
    # lane-dense 128-wide bf16 output store (padding sliced away in the wrapper)
    out = (jnp.dot(hseq_scr[...], wout_ref[...],
                   preferred_element_type=jnp.float32) + bout_ref[...])
    y_ref[...] = out.astype(y_ref.dtype)


@jax.jit
def sxlstm_forward(x_bti, lengths, w_ih_T, w_hh_T, b, w_out_T, b_out, h0, c0):
    """x_bti: (B, T, I) f32 (batch_first), lengths: (B,) int. Returns (B, T, O)."""
    B, T, I = x_bti.shape
    H = h0.shape[1]
    O = w_out_T.shape[1]
    H4 = 4 * H

    BT = 8                                   # batch-tile rows (sublane multiple)
    B_pad = _round_up(B, BT)
    n_btiles = B_pad // BT
    O_pad = _round_up(O, 128)                # lane-dense head output

    # Time-block size from an explicit VMEM budget (safe on v7x 64 MiB and on
    # v5e's 16 MiB scoped default once vmem_limit_bytes is raised below).
    vmem_limit = 32 * 1024 * 1024
    TT = _pick_tt(T, BT, H, O_pad, int(0.8 * vmem_limit))
    n_blocks = T // TT
    rows_blk = TT * BT

    # Row layout: row = btile*(T*BT) + t*BT + b_in_tile  (batch-tile-major, then
    # time, then batch-in-tile) -> every (btile, time-block) block is a
    # contiguous, rectangular 2-D slab; no in-kernel reshapes.
    x_pad = jnp.pad(x_bti.astype(jnp.float32),
                    ((0, B_pad - B), (0, 0), (0, 0)))
    x_rows = jnp.transpose(x_pad.reshape(n_btiles, BT, T, I),
                           (0, 2, 1, 3)).reshape(n_btiles * T * BT, I)

    # Gate-permuted weights (i, f, o, g); x-projection hoisted into XLA so the
    # kernel streams a lane-dense (rows, 4H) gx block instead of a 4-lane x.
    wih_p = _permute_gates(w_ih_T, H).astype(jnp.bfloat16)
    whh_p = _permute_gates(w_hh_T, H).astype(jnp.bfloat16)
    b_p = _permute_gates(b, H)
    gx = (jnp.dot(x_rows.astype(jnp.bfloat16), wih_p,
                  preferred_element_type=jnp.float32) + b_p)

    wout_bf = jnp.pad(w_out_T, ((0, 0), (0, O_pad - O))).astype(jnp.bfloat16)
    bout_pad = jnp.pad(b_out, ((0, 0), (0, O_pad - O)))

    len_pad = jnp.pad(lengths.astype(jnp.int32), (0, B_pad - B)).reshape(B_pad, 1)
    h0_pad = jnp.pad(h0, ((0, B_pad - B), (0, 0)))
    c0_pad = jnp.pad(c0, ((0, B_pad - B), (0, 0)))

    # Constant-index operands (whh/wout/bias/lengths/h0/c0) could additionally
    # be marked pipeline_mode=pl.Buffered(1) to drop their idle second buffer;
    # negligible at H=32 so left at the default here.
    y2d = pl.pallas_call(
        sxlstm_kernel,
        out_shape=jax.ShapeDtypeStruct((n_btiles * T * BT, O_pad), jnp.bfloat16),
        grid_spec=pltpu.PrefetchScalarGridSpec(
            num_scalar_prefetch=0,
            grid=(n_btiles, n_blocks),       # batch tiles parallel, time serial
            in_specs=[
                pl.BlockSpec((rows_blk, H4),
                             lambda bt, n: (bt * n_blocks + n, 0)),   # gx block
                pl.BlockSpec((H, H4), lambda bt, n: (0, 0)),          # W_hh^T
                pl.BlockSpec((H, O_pad), lambda bt, n: (0, 0)),       # W_out^T
                pl.BlockSpec((1, O_pad), lambda bt, n: (0, 0)),       # b_out
                pl.BlockSpec((BT, 1), lambda bt, n: (bt, 0)),         # lengths
                pl.BlockSpec((BT, H), lambda bt, n: (bt, 0)),         # h0
                pl.BlockSpec((BT, H), lambda bt, n: (bt, 0)),         # c0
            ],
            out_specs=pl.BlockSpec((rows_blk, O_pad),
                                   lambda bt, n: (bt * n_blocks + n, 0)),
            scratch_shapes=[
                pltpu.VMEM((BT, H), jnp.float32),            # h state
                pltpu.VMEM((BT, H), jnp.float32),            # c state
                pltpu.VMEM((rows_blk, H), jnp.bfloat16),     # masked h sequence
            ],
        ),
        compiler_params=pltpu.CompilerParams(
            dimension_semantics=("parallel", "arbitrary"),
            vmem_limit_bytes=vmem_limit),
    )(gx, whh_p, wout_bf, bout_pad, len_pad, h0_pad, c0_pad)

    # undo padding / row layout; cast head output back to f32
    y = y2d.reshape(n_btiles, T, BT, O_pad)[..., :O]
    y = jnp.transpose(y, (0, 2, 1, 3)).reshape(B_pad, T, O)[:B]
    return y.astype(jnp.float32)                                  # (B, T, O)


def ref_forward(x, lengths, w_ih_T, w_hh_T, b, w_out_T, b_out, h0, c0,
                matmul_dtype=jnp.float32):
    """Pure-JAX reference. matmul_dtype=bfloat16 mirrors the kernel's MXU precision."""
    B, T, I = x.shape
    H = h0.shape[1]
    wih = w_ih_T.astype(matmul_dtype)
    whh = w_hh_T.astype(matmul_dtype)
    wout = w_out_T.astype(matmul_dtype)

    def step(carry, inp):
        h, c = carry
        xt, t = inp
        gates = (jnp.dot(xt.astype(matmul_dtype), wih, preferred_element_type=jnp.float32)
                 + jnp.dot(h.astype(matmul_dtype), whh, preferred_element_type=jnp.float32)
                 + b)
        i_g = jax.nn.sigmoid(gates[:, :H])
        f_g = jax.nn.sigmoid(gates[:, H:2 * H])
        g_g = jnp.tanh(gates[:, 2 * H:3 * H])
        o_g = jax.nn.sigmoid(gates[:, 3 * H:])
        c_new = f_g * c + i_g * g_g
        h_new = o_g * jnp.tanh(c_new)
        mask = (lengths > t)[:, None]
        h = jnp.where(mask, h_new, h)
        c = jnp.where(mask, c_new, c)
        y = jnp.where(mask, h, 0.0)
        out = jnp.dot(y.astype(matmul_dtype), wout,
                      preferred_element_type=jnp.float32) + b_out
        return (h, c), out

    xs = (jnp.transpose(x, (1, 0, 2)), jnp.arange(T))
    _, outs = jax.lax.scan(step, (h0, c0), xs)
    return jnp.transpose(outs, (1, 0, 2))


if __name__ == "__main__":
    # SXlstm(input_size=4, h_size=32, layers=1, out_size=1), batch=4, seq=8
    B, T, I, H, O = 4, 8, 4, 32, 1

    key = jax.random.PRNGKey(0)
    kx, kh, kc, k1, k2, k3, k4, k5, k6 = jax.random.split(key, 9)

    # PyTorch-style uniform(-1/sqrt(H), 1/sqrt(H)) init, deterministic
    bound = 1.0 / math.sqrt(H)
    w_ih_T = jax.random.uniform(k1, (I, 4 * H), jnp.float32, -bound, bound)
    w_hh_T = jax.random.uniform(k2, (H, 4 * H), jnp.float32, -bound, bound)
    b_ih = jax.random.uniform(k3, (1, 4 * H), jnp.float32, -bound, bound)
    b_hh = jax.random.uniform(k4, (1, 4 * H), jnp.float32, -bound, bound)
    b = b_ih + b_hh
    w_out_T = jax.random.uniform(k5, (H, O), jnp.float32, -bound, bound)
    b_out = jax.random.uniform(k6, (1, O), jnp.float32, -bound, bound)

    x = jax.random.normal(kx, (B, T, I), jnp.float32)
    # reset_state() randn initial state, drawn deterministically here.
    h0 = jax.random.normal(kh, (B, H), jnp.float32)
    c0 = jax.random.normal(kc, (B, H), jnp.float32)
    # max(lengths) must equal T (required by the original module's final .view)
    lengths = jnp.array([8, 5, 8, 3], dtype=jnp.int32)

    out = sxlstm_forward(x, lengths, w_ih_T, w_hh_T, b, w_out_T, b_out, h0, c0)
    out = jax.block_until_ready(out)
    assert out.shape == (B, T, O)

    # Check vs a reference that mirrors the kernel's bf16-MXU / f32-VPU split
    # (tolerance includes the bf16 quantization of the kernel's output store).
    ref_bf = ref_forward(x, lengths, w_ih_T, w_hh_T, b, w_out_T, b_out, h0, c0,
                         matmul_dtype=jnp.bfloat16)
    assert jnp.allclose(out, ref_bf, atol=5e-3, rtol=5e-3), \
        "mismatch vs mixed-precision JAX reference"

    # Sanity check vs the full-f32 reference (within bf16 matmul precision budget).
    ref_f32 = ref_forward(x, lengths, w_ih_T, w_hh_T, b, w_out_T, b_out, h0, c0,
                          matmul_dtype=jnp.float32)
    assert jnp.allclose(out, ref_f32, atol=1e-1, rtol=1e-1), \
        "mismatch vs f32 JAX reference"

    print("KERNEL_OK")
</pallas_src>

<mosaic_0001>
module attributes {stable_mosaic.version = 11 : i64} {
  func.func @sxlstm_kernel(%arg0: i32, %arg1: i32, %arg2: memref<64x128xf32, #tpu.memory_space<vmem>>, %arg3: memref<32x128xbf16, #tpu.memory_space<vmem>>, %arg4: memref<32x128xbf16, #tpu.memory_space<vmem>>, %arg5: memref<1x128xf32, #tpu.memory_space<vmem>>, %arg6: memref<8x1xi32, #tpu.memory_space<vmem>>, %arg7: memref<8x32xf32, #tpu.memory_space<vmem>>, %arg8: memref<8x32xf32, #tpu.memory_space<vmem>>, %arg9: memref<64x128xbf16, #tpu.memory_space<vmem>>, %arg10: memref<8x32xf32, #tpu.memory_space<vmem>>, %arg11: memref<8x32xf32, #tpu.memory_space<vmem>>, %arg12: memref<64x32xbf16, #tpu.memory_space<vmem>>) attributes {dimension_semantics = [#tpu.dimension_semantics<parallel>, #tpu.dimension_semantics<arbitrary>], iteration_bounds = array<i64: 1, 1>, scalar_prefetch = 0 : i64, scratch_operands = 3 : i64, tpu.core_type = #tpu.core_type<tc>, window_params = [{transform_indices = @transform_0, window_bounds = array<i64: 64, 128>}, {pipeline_mode = #tpu.pipeline_mode<synchronous>, transform_indices = @transform_1, window_bounds = array<i64: 32, 128>}, {pipeline_mode = #tpu.pipeline_mode<synchronous>, transform_indices = @transform_2, window_bounds = array<i64: 32, 128>}, {pipeline_mode = #tpu.pipeline_mode<synchronous>, transform_indices = @transform_3, window_bounds = array<i64: 1, 128>}, {transform_indices = @transform_4, window_bounds = array<i64: 8, 1>}, {transform_indices = @transform_5, window_bounds = array<i64: 8, 32>}, {transform_indices = @transform_6, window_bounds = array<i64: 8, 32>}, {transform_indices = @transform_7, window_bounds = array<i64: 64, 128>}]} {
    %c0_i32 = arith.constant 0 : i32
    %0 = arith.cmpi eq, %arg1, %c0_i32 : i32
    %1 = arith.extui %0 : i1 to i32
    %c0_i32_0 = arith.constant 0 : i32
    %2 = arith.cmpi ne, %1, %c0_i32_0 : i32
    scf.if %2 {
      %c0_118 = arith.constant 0 : index
      %c0_119 = arith.constant 0 : index
      %366 = vector.load %arg7[%c0_118, %c0_119] : memref<8x32xf32, #tpu.memory_space<vmem>>, vector<8x32xf32>
      %c0_120 = arith.constant 0 : index
      %c0_121 = arith.constant 0 : index
      %367 = vector.load %arg10[%c0_120, %c0_121] : memref<8x32xf32, #tpu.memory_space<vmem>>, vector<8x32xf32>
      tpu.vector_store %arg10[%c0_120, %c0_121], %366 {strides = array<i32>} : memref<8x32xf32, #tpu.memory_space<vmem>>, vector<8x32xf32>,
      %c0_122 = arith.constant 0 : index
      %c0_123 = arith.constant 0 : index
      %368 = vector.load %arg8[%c0_122, %c0_123] : memref<8x32xf32, #tpu.memory_space<vmem>>, vector<8x32xf32>
      %c0_124 = arith.constant 0 : index
      %c0_125 = arith.constant 0 : index
      %369 = vector.load %arg11[%c0_124, %c0_125] : memref<8x32xf32, #tpu.memory_space<vmem>>, vector<8x32xf32>
      tpu.vector_store %arg11[%c0_124, %c0_125], %368 {strides = array<i32>} : memref<8x32xf32, #tpu.memory_space<vmem>>, vector<8x32xf32>,
    } else {
    }
    %c0 = arith.constant 0 : index
    %c0_1 = arith.constant 0 : index
    %3 = vector.load %arg3[%c0, %c0_1] : memref<32x128xbf16, #tpu.memory_space<vmem>>, vector<32x128xbf16>
    %c0_2 = arith.constant 0 : index
    %c0_3 = arith.constant 0 : index
    %4 = vector.load %arg6[%c0_2, %c0_3] : memref<8x1xi32, #tpu.memory_space<vmem>>, vector<8x1xi32>
    %c8_i32 = arith.constant 8 : i32
    %5 = arith.muli %arg1, %c8_i32 : i32
    %c0_i32_4 = arith.constant 0 : i32
    %c8_i32_5 = arith.constant 8 : i32
    %6 = arith.muli %c0_i32_4, %c8_i32_5 : i32
    %7 = tpu.assume_multiple %6, 8 : i32
    %c0_6 = arith.constant 0 : index
    %c0_7 = arith.constant 0 : index
    %8 = vector.load %arg10[%c0_6, %c0_7] : memref<8x32xf32, #tpu.memory_space<vmem>>, vector<8x32xf32>
    %c0_8 = arith.constant 0 : index
    %c0_9 = arith.constant 0 : index
    %9 = vector.load %arg11[%c0_8, %c0_9] : memref<8x32xf32, #tpu.memory_space<vmem>>, vector<8x32xf32>
    %10 = arith.index_cast %7 : i32 to index
    %c0_10 = arith.constant 0 : index
    %11 = vector.load %arg2[%10, %c0_10] : memref<64x128xf32, #tpu.memory_space<vmem>>, vector<8x128xf32>
    %12 = arith.truncf %8 : vector<8x32xf32> to vector<8x32xbf16>
    %cst = arith.constant dense<0.000000e+00> : vector<8x128xf32>
    %13 = tpu.matmul %12, %3, %cst {dimension_numbers = #tpu.dot_dimension_numbers<[1], [0], [0], [1], [0, 0, 1, 1], [], []>} : vector<8x32xbf16>, vector<32x128xbf16>, vector<8x128xf32> -> vector<8x128xf32>
    %14 = arith.addf %11, %13 : vector<8x128xf32>
    %15 = vector.extract_strided_slice %14 {offsets = [0, 0], sizes = [8, 96], strides = [1, 1]} : vector<8x128xf32> to vector<8x96xf32>
    %16 = arith.negf %15 : vector<8x96xf32>
    %17 = math.exp %16 : vector<8x96xf32>
    %cst_11 = arith.constant 1.000000e+00 : f32
    %18 = vector.broadcast %cst_11 : f32 to vector<8x96xf32>
    %19 = arith.addf %18, %17 : vector<8x96xf32>
    %20 = arith.divf %18, %19 : vector<8x96xf32>
    %21 = vector.extract_strided_slice %14 {offsets = [0, 96], sizes = [8, 32], strides = [1, 1]} : vector<8x128xf32> to vector<8x32xf32>
    %22 = math.tanh %21 : vector<8x32xf32>
    %23 = vector.extract_strided_slice %20 {offsets = [0, 0], sizes = [8, 32], strides = [1, 1]} : vector<8x96xf32> to vector<8x32xf32>
    %24 = vector.extract_strided_slice %20 {offsets = [0, 32], sizes = [8, 32], strides = [1, 1]} : vector<8x96xf32> to vector<8x32xf32>
    %25 = vector.extract_strided_slice %20 {offsets = [0, 64], sizes = [8, 32], strides = [1, 1]} : vector<8x96xf32> to vector<8x32xf32>
    %26 = arith.mulf %24, %9 : vector<8x32xf32>
    %27 = arith.mulf %23, %22 : vector<8x32xf32>
    %28 = arith.addf %26, %27 : vector<8x32xf32>
    %29 = math.tanh %28 : vector<8x32xf32>
    %30 = arith.mulf %25, %29 : vector<8x32xf32>
    %31 = arith.addi %5, %c0_i32_4 : i32
    %32 = vector.broadcast %31 : i32 to vector<8x1xi32>
    %33 = arith.cmpi sgt, %4, %32 : vector<8x1xi32>
    %34 = arith.extui %33 : vector<8x1xi1> to vector<8x1xi32>
    %35 = arith.sitofp %34 : vector<8x1xi32> to vector<8x1xf32>
    %36 = vector.shape_cast %35 : vector<8x1xf32> to vector<8x1xf32>
    %37 = vector.broadcast %36 : vector<8x1xf32> to vector<8x32xf32>
    %38 = arith.subf %30, %8 : vector<8x32xf32>
    %39 = arith.mulf %37, %38 : vector<8x32xf32>
    %40 = arith.addf %8, %39 : vector<8x32xf32>
    %41 = arith.subf %28, %9 : vector<8x32xf32>
    %42 = arith.mulf %37, %41 : vector<8x32xf32>
    %43 = arith.addf %9, %42 : vector<8x32xf32>
    %c0_12 = arith.constant 0 : index
    %c0_13 = arith.constant 0 : index
    %44 = vector.load %arg10[%c0_12, %c0_13] : memref<8x32xf32, #tpu.memory_space<vmem>>, vector<8x32xf32>
    tpu.vector_store %arg10[%c0_12, %c0_13], %40 {strides = array<i32>} : memref<8x32xf32, #tpu.memory_space<vmem>>, vector<8x32xf32>,
    %c0_14 = arith.constant 0 : index
    %c0_15 = arith.constant 0 : index
    %45 = vector.load %arg11[%c0_14, %c0_15] : memref<8x32xf32, #tpu.memory_space<vmem>>, vector<8x32xf32>
    tpu.vector_store %arg11[%c0_14, %c0_15], %43 {strides = array<i32>} : memref<8x32xf32, #tpu.memory_space<vmem>>, vector<8x32xf32>,
    %46 = arith.mulf %37, %40 : vector<8x32xf32>
    %47 = arith.truncf %46 : vector<8x32xf32> to vector<8x32xbf16>
    %48 = arith.index_cast %7 : i32 to index
    %c0_16 = arith.constant 0 : index
    %49 = vector.load %arg12[%48, %c0_16] : memref<64x32xbf16, #tpu.memory_space<vmem>>, vector<8x32xbf16>
    tpu.vector_store %arg12[%48, %c0_16], %47 {strides = array<i32>} : memref<64x32xbf16, #tpu.memory_space<vmem>>, vector<8x32xbf16>,
    %c1_i32 = arith.constant 1 : i32
    %c8_i32_17 = arith.constant 8 : i32
    %50 = arith.muli %c1_i32, %c8_i32_17 : i32
    %51 = tpu.assume_multiple %50, 8 : i32
    %c0_18 = arith.constant 0 : index
    %c0_19 = arith.constant 0 : index
    %52 = vector.load %arg10[%c0_18, %c0_19] : memref<8x32xf32, #tpu.memory_space<vmem>>, vector<8x32xf32>
    %c0_20 = arith.constant 0 : index
    %c0_21 = arith.constant 0 : index
    %53 = vector.load %arg11[%c0_20, %c0_21] : memref<8x32xf32, #tpu.memory_space<vmem>>, vector<8x32xf32>
    %54 = arith.index_cast %51 : i32 to index
    %c0_22 = arith.constant 0 : index
    %55 = vector.load %arg2[%54, %c0_22] : memref<64x128xf32, #tpu.memory_space<vmem>>, vector<8x128xf32>
    %56 = arith.truncf %52 : vector<8x32xf32> to vector<8x32xbf16>
    %cst_23 = arith.constant dense<0.000000e+00> : vector<8x128xf32>
    %57 = tpu.matmul %56, %3, %cst_23 {dimension_numbers = #tpu.dot_dimension_numbers<[1], [0], [0], [1], [0, 0, 1, 1], [], []>} : vector<8x32xbf16>, vector<32x128xbf16>, vector<8x128xf32> -> vector<8x128xf32>
    %58 = arith.addf %55, %57 : vector<8x128xf32>
    %59 = vector.extract_strided_slice %58 {offsets = [0, 0], sizes = [8, 96], strides = [1, 1]} : vector<8x128xf32> to vector<8x96xf32>
    %60 = arith.negf %59 : vector<8x96xf32>
    %61 = math.exp %60 : vector<8x96xf32>
    %cst_24 = arith.constant 1.000000e+00 : f32
    %62 = vector.broadcast %cst_24 : f32 to vector<8x96xf32>
    %63 = arith.addf %62, %61 : vector<8x96xf32>
    %64 = arith.divf %62, %63 : vector<8x96xf32>
    %65 = vector.extract_strided_slice %58 {offsets = [0, 96], sizes = [8, 32], strides = [1, 1]} : vector<8x128xf32> to vector<8x32xf32>
    %66 = math.tanh %65 : vector<8x32xf32>
    %67 = vector.extract_strided_slice %64 {offsets = [0, 0], sizes = [8, 32], strides = [1, 1]} : vector<8x96xf32> to vector<8x32xf32>
    %68 = vector.extract_strided_slice %64 {offsets = [0, 32], sizes = [8, 32], strides = [1, 1]} : vector<8x96xf32> to vector<8x32xf32>
    %69 = vector.extract_strided_slice %64 {offsets = [0, 64], sizes = [8, 32], strides = [1, 1]} : vector<8x96xf32> to vector<8x32xf32>
    %70 = arith.mulf %68, %53 : vector<8x32xf32>
    %71 = arith.mulf %67, %66 : vector<8x32xf32>
    %72 = arith.addf %70, %71 : vector<8x32xf32>
    %73 = math.tanh %72 : vector<8x32xf32>
    %74 = arith.mulf %69, %73 : vector<8x32xf32>
    %75 = arith.addi %5, %c1_i32 : i32
    %76 = vector.broadcast %75 : i32 to vector<8x1xi32>
    %77 = arith.cmpi sgt, %4, %76 : vector<8x1xi32>
    %78 = arith.extui %77 : vector<8x1xi1> to vector<8x1xi32>
    %79 = arith.sitofp %78 : vector<8x1xi32> to vector<8x1xf32>
    %80 = vector.shape_cast %79 : vector<8x1xf32> to vector<8x1xf32>
    %81 = vector.broadcast %80 : vector<8x1xf32> to vector<8x32xf32>
    %82 = arith.subf %74, %52 : vector<8x32xf32>
    %83 = arith.mulf %81, %82 : vector<8x32xf32>
    %84 = arith.addf %52, %83 : vector<8x32xf32>
    %85 = arith.subf %72, %53 : vector<8x32xf32>
    %86 = arith.mulf %81, %85 : vector<8x32xf32>
    %87 = arith.addf %53, %86 : vector<8x32xf32>
    %c0_25 = arith.constant 0 : index
    %c0_26 = arith.constant 0 : index
    %88 = vector.load %arg10[%c0_25, %c0_26] : memref<8x32xf32, #tpu.memory_space<vmem>>, vector<8x32xf32>
    tpu.vector_store %arg10[%c0_25, %c0_26], %84 {strides = array<i32>} : memref<8x32xf32, #tpu.memory_space<vmem>>, vector<8x32xf32>,
    %c0_27 = arith.constant 0 : index
    %c0_28 = arith.constant 0 : index
    %89 = vector.load %arg11[%c0_27, %c0_28] : memref<8x32xf32, #tpu.memory_space<vmem>>, vector<8x32xf32>
    tpu.vector_store %arg11[%c0_27, %c0_28], %87 {strides = array<i32>} : memref<8x32xf32, #tpu.memory_space<vmem>>, vector<8x32xf32>,
    %90 = arith.mulf %81, %84 : vector<8x32xf32>
    %91 = arith.truncf %90 : vector<8x32xf32> to vector<8x32xbf16>
    %92 = arith.index_cast %51 : i32 to index
    %c0_29 = arith.constant 0 : index
    %93 = vector.load %arg12[%92, %c0_29] : memref<64x32xbf16, #tpu.memory_space<vmem>>, vector<8x32xbf16>
    tpu.vector_store %arg12[%92, %c0_29], %91 {strides = array<i32>} : memref<64x32xbf16, #tpu.memory_space<vmem>>, vector<8x32xbf16>,
    %c2_i32 = arith.constant 2 : i32
    %c8_i32_30 = arith.constant 8 : i32
    %94 = arith.muli %c2_i32, %c8_i32_30 : i32
    %95 = tpu.assume_multiple %94, 8 : i32
    %c0_31 = arith.constant 0 : index
    %c0_32 = arith.constant 0 : index
    %96 = vector.load %arg10[%c0_31, %c0_32] : memref<8x32xf32, #tpu.memory_space<vmem>>, vector<8x32xf32>
    %c0_33 = arith.constant 0 : index
    %c0_34 = arith.constant 0 : index
    %97 = vector.load %arg11[%c0_33, %c0_34] : memref<8x32xf32, #tpu.memory_space<vmem>>, vector<8x32xf32>
    %98 = arith.index_cast %95 : i32 to index
    %c0_35 = arith.constant 0 : index
    %99 = vector.load %arg2[%98, %c0_35] : memref<64x128xf32, #tpu.memory_space<vmem>>, vector<8x128xf32>
    %100 = arith.truncf %96 : vector<8x32xf32> to vector<8x32xbf16>
    %cst_36 = arith.constant dense<0.000000e+00> : vector<8x128xf32>
    %101 = tpu.matmul %100, %3, %cst_36 {dimension_numbers = #tpu.dot_dimension_numbers<[1], [0], [0], [1], [0, 0, 1, 1], [], []>} : vector<8x32xbf16>, vector<32x128xbf16>, vector<8x128xf32> -> vector<8x128xf32>
    %102 = arith.addf %99, %101 : vector<8x128xf32>
    %103 = vector.extract_strided_slice %102 {offsets = [0, 0], sizes = [8, 96], strides = [1, 1]} : vector<8x128xf32> to vector<8x96xf32>
    %104 = arith.negf %103 : vector<8x96xf32>
    %105 = math.exp %104 : vector<8x96xf32>
    %cst_37 = arith.constant 1.000000e+00 : f32
    %106 = vector.broadcast %cst_37 : f32 to vector<8x96xf32>
    %107 = arith.addf %106, %105 : vector<8x96xf32>
    %108 = arith.divf %106, %107 : vector<8x96xf32>
    %109 = vector.extract_strided_slice %102 {offsets = [0, 96], sizes = [8, 32], strides = [1, 1]} : vector<8x128xf32> to vector<8x32xf32>
    %110 = math.tanh %109 : vector<8x32xf32>
    %111 = vector.extract_strided_slice %108 {offsets = [0, 0], sizes = [8, 32], strides = [1, 1]} : vector<8x96xf32> to vector<8x32xf32>
    %112 = vector.extract_strided_slice %108 {offsets = [0, 32], sizes = [8, 32], strides = [1, 1]} : vector<8x96xf32> to vector<8x32xf32>
    %113 = vector.extract_strided_slice %108 {offsets = [0, 64], sizes = [8, 32], strides = [1, 1]} : vector<8x96xf32> to vector<8x32xf32>
    %114 = arith.mulf %112, %97 : vector<8x32xf32>
    %115 = arith.mulf %111, %110 : vector<8x32xf32>
    %116 = arith.addf %114, %115 : vector<8x32xf32>
    %117 = math.tanh %116 : vector<8x32xf32>
    %118 = arith.mulf %113, %117 : vector<8x32xf32>
    %119 = arith.addi %5, %c2_i32 : i32
    %120 = vector.broadcast %119 : i32 to vector<8x1xi32>
    %121 = arith.cmpi sgt, %4, %120 : vector<8x1xi32>
    %122 = arith.extui %121 : vector<8x1xi1> to vector<8x1xi32>
    %123 = arith.sitofp %122 : vector<8x1xi32> to vector<8x1xf32>
    %124 = vector.shape_cast %123 : vector<8x1xf32> to vector<8x1xf32>
    %125 = vector.broadcast %124 : vector<8x1xf32> to vector<8x32xf32>
    %126 = arith.subf %118, %96 : vector<8x32xf32>
    %127 = arith.mulf %125, %126 : vector<8x32xf32>
    %128 = arith.addf %96, %127 : vector<8x32xf32>
    %129 = arith.subf %116, %97 : vector<8x32xf32>
    %130 = arith.mulf %125, %129 : vector<8x32xf32>
    %131 = arith.addf %97, %130 : vector<8x32xf32>
    %c0_38 = arith.constant 0 : index
    %c0_39 = arith.constant 0 : index
    %132 = vector.load %arg10[%c0_38, %c0_39] : memref<8x32xf32, #tpu.memory_space<vmem>>, vector<8x32xf32>
    tpu.vector_store %arg10[%c0_38, %c0_39], %128 {strides = array<i32>} : memref<8x32xf32, #tpu.memory_space<vmem>>, vector<8x32xf32>,
    %c0_40 = arith.constant 0 : index
    %c0_41 = arith.constant 0 : index
    %133 = vector.load %arg11[%c0_40, %c0_41] : memref<8x32xf32, #tpu.memory_space<vmem>>, vector<8x32xf32>
    tpu.vector_store %arg11[%c0_40, %c0_41], %131 {strides = array<i32>} : memref<8x32xf32, #tpu.memory_space<vmem>>, vector<8x32xf32>,
    %134 = arith.mulf %125, %128 : vector<8x32xf32>
    %135 = arith.truncf %134 : vector<8x32xf32> to vector<8x32xbf16>
    %136 = arith.index_cast %95 : i32 to index
    %c0_42 = arith.constant 0 : index
    %137 = vector.load %arg12[%136, %c0_42] : memref<64x32xbf16, #tpu.memory_space<vmem>>, vector<8x32xbf16>
    tpu.vector_store %arg12[%136, %c0_42], %135 {strides = array<i32>} : memref<64x32xbf16, #tpu.memory_space<vmem>>, vector<8x32xbf16>,
    %c3_i32 = arith.constant 3 : i32
    %c8_i32_43 = arith.constant 8 : i32
    %138 = arith.muli %c3_i32, %c8_i32_43 : i32
    %139 = tpu.assume_multiple %138, 8 : i32
    %c0_44 = arith.constant 0 : index
    %c0_45 = arith.constant 0 : index
    %140 = vector.load %arg10[%c0_44, %c0_45] : memref<8x32xf32, #tpu.memory_space<vmem>>, vector<8x32xf32>
    %c0_46 = arith.constant 0 : index
    %c0_47 = arith.constant 0 : index
    %141 = vector.load %arg11[%c0_46, %c0_47] : memref<8x32xf32, #tpu.memory_space<vmem>>, vector<8x32xf32>
    %142 = arith.index_cast %139 : i32 to index
    %c0_48 = arith.constant 0 : index
    %143 = vector.load %arg2[%142, %c0_48] : memref<64x128xf32, #tpu.memory_space<vmem>>, vector<8x128xf32>
    %144 = arith.truncf %140 : vector<8x32xf32> to vector<8x32xbf16>
    %cst_49 = arith.constant dense<0.000000e+00> : vector<8x128xf32>
    %145 = tpu.matmul %144, %3, %cst_49 {dimension_numbers = #tpu.dot_dimension_numbers<[1], [0], [0], [1], [0, 0, 1, 1], [], []>} : vector<8x32xbf16>, vector<32x128xbf16>, vector<8x128xf32> -> vector<8x128xf32>
    %146 = arith.addf %143, %145 : vector<8x128xf32>
    %147 = vector.extract_strided_slice %146 {offsets = [0, 0], sizes = [8, 96], strides = [1, 1]} : vector<8x128xf32> to vector<8x96xf32>
    %148 = arith.negf %147 : vector<8x96xf32>
    %149 = math.exp %148 : vector<8x96xf32>
    %cst_50 = arith.constant 1.000000e+00 : f32
    %150 = vector.broadcast %cst_50 : f32 to vector<8x96xf32>
    %151 = arith.addf %150, %149 : vector<8x96xf32>
    %152 = arith.divf %150, %151 : vector<8x96xf32>
    %153 = vector.extract_strided_slice %146 {offsets = [0, 96], sizes = [8, 32], strides = [1, 1]} : vector<8x128xf32> to vector<8x32xf32>
    %154 = math.tanh %153 : vector<8x32xf32>
    %155 = vector.extract_strided_slice %152 {offsets = [0, 0], sizes = [8, 32], strides = [1, 1]} : vector<8x96xf32> to vector<8x32xf32>
    %156 = vector.extract_strided_slice %152 {offsets = [0, 32], sizes = [8, 32], strides = [1, 1]} : vector<8x96xf32> to vector<8x32xf32>
    %157 = vector.extract_strided_slice %152 {offsets = [0, 64], sizes = [8, 32], strides = [1, 1]} : vector<8x96xf32> to vector<8x32xf32>
    %158 = arith.mulf %156, %141 : vector<8x32xf32>
    %159 = arith.mulf %155, %154 : vector<8x32xf32>
    %160 = arith.addf %158, %159 : vector<8x32xf32>
    %161 = math.tanh %160 : vector<8x32xf32>
    %162 = arith.mulf %157, %161 : vector<8x32xf32>
    %163 = arith.addi %5, %c3_i32 : i32
    %164 = vector.broadcast %163 : i32 to vector<8x1xi32>
    %165 = arith.cmpi sgt, %4, %164 : vector<8x1xi32>
    %166 = arith.extui %165 : vector<8x1xi1> to vector<8x1xi32>
    %167 = arith.sitofp %166 : vector<8x1xi32> to vector<8x1xf32>
    %168 = vector.shape_cast %167 : vector<8x1xf32> to vector<8x1xf32>
    %169 = vector.broadcast %168 : vector<8x1xf32> to vector<8x32xf32>
    %170 = arith.subf %162, %140 : vector<8x32xf32>
    %171 = arith.mulf %169, %170 : vector<8x32xf32>
    %172 = arith.addf %140, %171 : vector<8x32xf32>
    %173 = arith.subf %160, %141 : vector<8x32xf32>
    %174 = arith.mulf %169, %173 : vector<8x32xf32>
    %175 = arith.addf %141, %174 : vector<8x32xf32>
    %c0_51 = arith.constant 0 : index
    %c0_52 = arith.constant 0 : index
    %176 = vector.load %arg10[%c0_51, %c0_52] : memref<8x32xf32, #tpu.memory_space<vmem>>, vector<8x32xf32>
    tpu.vector_store %arg10[%c0_51, %c0_52], %172 {strides = array<i32>} : memref<8x32xf32, #tpu.memory_space<vmem>>, vector<8x32xf32>,
    %c0_53 = arith.constant 0 : index
    %c0_54 = arith.constant 0 : index
    %177 = vector.load %arg11[%c0_53, %c0_54] : memref<8x32xf32, #tpu.memory_space<vmem>>, vector<8x32xf32>
    tpu.vector_store %arg11[%c0_53, %c0_54], %175 {strides = array<i32>} : memref<8x32xf32, #tpu.memory_space<vmem>>, vector<8x32xf32>,
    %178 = arith.mulf %169, %172 : vector<8x32xf32>
    %179 = arith.truncf %178 : vector<8x32xf32> to vector<8x32xbf16>
    %180 = arith.index_cast %139 : i32 to index
    %c0_55 = arith.constant 0 : index
    %181 = vector.load %arg12[%180, %c0_55] : memref<64x32xbf16, #tpu.memory_space<vmem>>, vector<8x32xbf16>
    tpu.vector_store %arg12[%180, %c0_55], %179 {strides = array<i32>} : memref<64x32xbf16, #tpu.memory_space<vmem>>, vector<8x32xbf16>,
    %c4_i32 = arith.constant 4 : i32
    %c8_i32_56 = arith.constant 8 : i32
    %182 = arith.muli %c4_i32, %c8_i32_56 : i32
    %183 = tpu.assume_multiple %182, 8 : i32
    %c0_57 = arith.constant 0 : index
    %c0_58 = arith.constant 0 : index
    %184 = vector.load %arg10[%c0_57, %c0_58] : memref<8x32xf32, #tpu.memory_space<vmem>>, vector<8x32xf32>
    %c0_59 = arith.constant 0 : index
    %c0_60 = arith.constant 0 : index
    %185 = vector.load %arg11[%c0_59, %c0_60] : memref<8x32xf32, #tpu.memory_space<vmem>>, vector<8x32xf32>
    %186 = arith.index_cast %183 : i32 to index
    %c0_61 = arith.constant 0 : index
    %187 = vector.load %arg2[%186, %c0_61] : memref<64x128xf32, #tpu.memory_space<vmem>>, vector<8x128xf32>
    %188 = arith.truncf %184 : vector<8x32xf32> to vector<8x32xbf16>
    %cst_62 = arith.constant dense<0.000000e+00> : vector<8x128xf32>
    %189 = tpu.matmul %188, %3, %cst_62 {dimension_numbers = #tpu.dot_dimension_numbers<[1], [0], [0], [1], [0, 0, 1, 1], [], []>} : vector<8x32xbf16>, vector<32x128xbf16>, vector<8x128xf32> -> vector<8x128xf32>
    %190 = arith.addf %187, %189 : vector<8x128xf32>
    %191 = vector.extract_strided_slice %190 {offsets = [0, 0], sizes = [8, 96], strides = [1, 1]} : vector<8x128xf32> to vector<8x96xf32>
    %192 = arith.negf %191 : vector<8x96xf32>
    %193 = math.exp %192 : vector<8x96xf32>
    %cst_63 = arith.constant 1.000000e+00 : f32
    %194 = vector.broadcast %cst_63 : f32 to vector<8x96xf32>
    %195 = arith.addf %194, %193 : vector<8x96xf32>
    %196 = arith.divf %194, %195 : vector<8x96xf32>
    %197 = vector.extract_strided_slice %190 {offsets = [0, 96], sizes = [8, 32], strides = [1, 1]} : vector<8x128xf32> to vector<8x32xf32>
    %198 = math.tanh %197 : vector<8x32xf32>
    %199 = vector.extract_strided_slice %196 {offsets = [0, 0], sizes = [8, 32], strides = [1, 1]} : vector<8x96xf32> to vector<8x32xf32>
    %200 = vector.extract_strided_slice %196 {offsets = [0, 32], sizes = [8, 32], strides = [1, 1]} : vector<8x96xf32> to vector<8x32xf32>
    %201 = vector.extract_strided_slice %196 {offsets = [0, 64], sizes = [8, 32], strides = [1, 1]} : vector<8x96xf32> to vector<8x32xf32>
    %202 = arith.mulf %200, %185 : vector<8x32xf32>
    %203 = arith.mulf %199, %198 : vector<8x32xf32>
    %204 = arith.addf %202, %203 : vector<8x32xf32>
    %205 = math.tanh %204 : vector<8x32xf32>
    %206 = arith.mulf %201, %205 : vector<8x32xf32>
    %207 = arith.addi %5, %c4_i32 : i32
    %208 = vector.broadcast %207 : i32 to vector<8x1xi32>
    %209 = arith.cmpi sgt, %4, %208 : vector<8x1xi32>
    %210 = arith.extui %209 : vector<8x1xi1> to vector<8x1xi32>
    %211 = arith.sitofp %210 : vector<8x1xi32> to vector<8x1xf32>
    %212 = vector.shape_cast %211 : vector<8x1xf32> to vector<8x1xf32>
    %213 = vector.broadcast %212 : vector<8x1xf32> to vector<8x32xf32>
    %214 = arith.subf %206, %184 : vector<8x32xf32>
    %215 = arith.mulf %213, %214 : vector<8x32xf32>
    %216 = arith.addf %184, %215 : vector<8x32xf32>
    %217 = arith.subf %204, %185 : vector<8x32xf32>
    %218 = arith.mulf %213, %217 : vector<8x32xf32>
    %219 = arith.addf %185, %218 : vector<8x32xf32>
    %c0_64 = arith.constant 0 : index
    %c0_65 = arith.constant 0 : index
    %220 = vector.load %arg10[%c0_64, %c0_65] : memref<8x32xf32, #tpu.memory_space<vmem>>, vector<8x32xf32>
    tpu.vector_store %arg10[%c0_64, %c0_65], %216 {strides = array<i32>} : memref<8x32xf32, #tpu.memory_space<vmem>>, vector<8x32xf32>,
    %c0_66 = arith.constant 0 : index
    %c0_67 = arith.constant 0 : index
    %221 = vector.load %arg11[%c0_66, %c0_67] : memref<8x32xf32, #tpu.memory_space<vmem>>, vector<8x32xf32>
    tpu.vector_store %arg11[%c0_66, %c0_67], %219 {strides = array<i32>} : memref<8x32xf32, #tpu.memory_space<vmem>>, vector<8x32xf32>,
    %222 = arith.mulf %213, %216 : vector<8x32xf32>
    %223 = arith.truncf %222 : vector<8x32xf32> to vector<8x32xbf16>
    %224 = arith.index_cast %183 : i32 to index
    %c0_68 = arith.constant 0 : index
    %225 = vector.load %arg12[%224, %c0_68] : memref<64x32xbf16, #tpu.memory_space<vmem>>, vector<8x32xbf16>
    tpu.vector_store %arg12[%224, %c0_68], %223 {strides = array<i32>} : memref<64x32xbf16, #tpu.memory_space<vmem>>, vector<8x32xbf16>,
    %c5_i32 = arith.constant 5 : i32
    %c8_i32_69 = arith.constant 8 : i32
    %226 = arith.muli %c5_i32, %c8_i32_69 : i32
    %227 = tpu.assume_multiple %226, 8 : i32
    %c0_70 = arith.constant 0 : index
    %c0_71 = arith.constant 0 : index
    %228 = vector.load %arg10[%c0_70, %c0_71] : memref<8x32xf32, #tpu.memory_space<vmem>>, vector<8x32xf32>
    %c0_72 = arith.constant 0 : index
    %c0_73 = arith.constant 0 : index
    %229 = vector.load %arg11[%c0_72, %c0_73] : memref<8x32xf32, #tpu.memory_space<vmem>>, vector<8x32xf32>
    %230 = arith.index_cast %227 : i32 to index
    %c0_74 = arith.constant 0 : index
    %231 = vector.load %arg2[%230, %c0_74] : memref<64x128xf32, #tpu.memory_space<vmem>>, vector<8x128xf32>
    %232 = arith.truncf %228 : vector<8x32xf32> to vector<8x32xbf16>
    %cst_75 = arith.constant dense<0.000000e+00> : vector<8x128xf32>
    %233 = tpu.matmul %232, %3, %cst_75 {dimension_numbers = #tpu.dot_dimension_numbers<[1], [0], [0], [1], [0, 0, 1, 1], [], []>} : vector<8x32xbf16>, vector<32x128xbf16>, vector<8x128xf32> -> vector<8x128xf32>
    %234 = arith.addf %231, %233 : vector<8x128xf32>
    %235 = vector.extract_strided_slice %234 {offsets = [0, 0], sizes = [8, 96], strides = [1, 1]} : vector<8x128xf32> to vector<8x96xf32>
    %236 = arith.negf %235 : vector<8x96xf32>
    %237 = math.exp %236 : vector<8x96xf32>
    %cst_76 = arith.constant 1.000000e+00 : f32
    %238 = vector.broadcast %cst_76 : f32 to vector<8x96xf32>
    %239 = arith.addf %238, %237 : vector<8x96xf32>
    %240 = arith.divf %238, %239 : vector<8x96xf32>
    %241 = vector.extract_strided_slice %234 {offsets = [0, 96], sizes = [8, 32], strides = [1, 1]} : vector<8x128xf32> to vector<8x32xf32>
    %242 = math.tanh %241 : vector<8x32xf32>
    %243 = vector.extract_strided_slice %240 {offsets = [0, 0], sizes = [8, 32], strides = [1, 1]} : vector<8x96xf32> to vector<8x32xf32>
    %244 = vector.extract_strided_slice %240 {offsets = [0, 32], sizes = [8, 32], strides = [1, 1]} : vector<8x96xf32> to vector<8x32xf32>
    %245 = vector.extract_strided_slice %240 {offsets = [0, 64], sizes = [8, 32], strides = [1, 1]} : vector<8x96xf32> to vector<8x32xf32>
    %246 = arith.mulf %244, %229 : vector<8x32xf32>
    %247 = arith.mulf %243, %242 : vector<8x32xf32>
    %248 = arith.addf %246, %247 : vector<8x32xf32>
    %249 = math.tanh %248 : vector<8x32xf32>
    %250 = arith.mulf %245, %249 : vector<8x32xf32>
    %251 = arith.addi %5, %c5_i32 : i32
    %252 = vector.broadcast %251 : i32 to vector<8x1xi32>
    %253 = arith.cmpi sgt, %4, %252 : vector<8x1xi32>
    %254 = arith.extui %253 : vector<8x1xi1> to vector<8x1xi32>
    %255 = arith.sitofp %254 : vector<8x1xi32> to vector<8x1xf32>
    %256 = vector.shape_cast %255 : vector<8x1xf32> to vector<8x1xf32>
    %257 = vector.broadcast %256 : vector<8x1xf32> to vector<8x32xf32>
    %258 = arith.subf %250, %228 : vector<8x32xf32>
    %259 = arith.mulf %257, %258 : vector<8x32xf32>
    %260 = arith.addf %228, %259 : vector<8x32xf32>
    %261 = arith.subf %248, %229 : vector<8x32xf32>
    %262 = arith.mulf %257, %261 : vector<8x32xf32>
    %263 = arith.addf %229, %262 : vector<8x32xf32>
    %c0_77 = arith.constant 0 : index
    %c0_78 = arith.constant 0 : index
    %264 = vector.load %arg10[%c0_77, %c0_78] : memref<8x32xf32, #tpu.memory_space<vmem>>, vector<8x32xf32>
    tpu.vector_store %arg10[%c0_77, %c0_78], %260 {strides = array<i32>} : memref<8x32xf32, #tpu.memory_space<vmem>>, vector<8x32xf32>,
    %c0_79 = arith.constant 0 : index
    %c0_80 = arith.constant 0 : index
    %265 = vector.load %arg11[%c0_79, %c0_80] : memref<8x32xf32, #tpu.memory_space<vmem>>, vector<8x32xf32>
    tpu.vector_store %arg11[%c0_79, %c0_80], %263 {strides = array<i32>} : memref<8x32xf32, #tpu.memory_space<vmem>>, vector<8x32xf32>,
    %266 = arith.mulf %257, %260 : vector<8x32xf32>
    %267 = arith.truncf %266 : vector<8x32xf32> to vector<8x32xbf16>
    %268 = arith.index_cast %227 : i32 to index
    %c0_81 = arith.constant 0 : index
    %269 = vector.load %arg12[%268, %c0_81] : memref<64x32xbf16, #tpu.memory_space<vmem>>, vector<8x32xbf16>
    tpu.vector_store %arg12[%268, %c0_81], %267 {strides = array<i32>} : memref<64x32xbf16, #tpu.memory_space<vmem>>, vector<8x32xbf16>,
    %c6_i32 = arith.constant 6 : i32
    %c8_i32_82 = arith.constant 8 : i32
    %270 = arith.muli %c6_i32, %c8_i32_82 : i32
    %271 = tpu.assume_multiple %270, 8 : i32
    %c0_83 = arith.constant 0 : index
    %c0_84 = arith.constant 0 : index
    %272 = vector.load %arg10[%c0_83, %c0_84] : memref<8x32xf32, #tpu.memory_space<vmem>>, vector<8x32xf32>
    %c0_85 = arith.constant 0 : index
    %c0_86 = arith.constant 0 : index
    %273 = vector.load %arg11[%c0_85, %c0_86] : memref<8x32xf32, #tpu.memory_space<vmem>>, vector<8x32xf32>
    %274 = arith.index_cast %271 : i32 to index
    %c0_87 = arith.constant 0 : index
    %275 = vector.load %arg2[%274, %c0_87] : memref<64x128xf32, #tpu.memory_space<vmem>>, vector<8x128xf32>
    %276 = arith.truncf %272 : vector<8x32xf32> to vector<8x32xbf16>
    %cst_88 = arith.constant dense<0.000000e+00> : vector<8x128xf32>
    %277 = tpu.matmul %276, %3, %cst_88 {dimension_numbers = #tpu.dot_dimension_numbers<[1], [0], [0], [1], [0, 0, 1, 1], [], []>} : vector<8x32xbf16>, vector<32x128xbf16>, vector<8x128xf32> -> vector<8x128xf32>
    %278 = arith.addf %275, %277 : vector<8x128xf32>
    %279 = vector.extract_strided_slice %278 {offsets = [0, 0], sizes = [8, 96], strides = [1, 1]} : vector<8x128xf32> to vector<8x96xf32>
    %280 = arith.negf %279 : vector<8x96xf32>
    %281 = math.exp %280 : vector<8x96xf32>
    %cst_89 = arith.constant 1.000000e+00 : f32
    %282 = vector.broadcast %cst_89 : f32 to vector<8x96xf32>
    %283 = arith.addf %282, %281 : vector<8x96xf32>
    %284 = arith.divf %282, %283 : vector<8x96xf32>
    %285 = vector.extract_strided_slice %278 {offsets = [0, 96], sizes = [8, 32], strides = [1, 1]} : vector<8x128xf32> to vector<8x32xf32>
    %286 = math.tanh %285 : vector<8x32xf32>
    %287 = vector.extract_strided_slice %284 {offsets = [0, 0], sizes = [8, 32], strides = [1, 1]} : vector<8x96xf32> to vector<8x32xf32>
    %288 = vector.extract_strided_slice %284 {offsets = [0, 32], sizes = [8, 32], strides = [1, 1]} : vector<8x96xf32> to vector<8x32xf32>
    %289 = vector.extract_strided_slice %284 {offsets = [0, 64], sizes = [8, 32], strides = [1, 1]} : vector<8x96xf32> to vector<8x32xf32>
    %290 = arith.mulf %288, %273 : vector<8x32xf32>
    %291 = arith.mulf %287, %286 : vector<8x32xf32>
    %292 = arith.addf %290, %291 : vector<8x32xf32>
    %293 = math.tanh %292 : vector<8x32xf32>
    %294 = arith.mulf %289, %293 : vector<8x32xf32>
    %295 = arith.addi %5, %c6_i32 : i32
    %296 = vector.broadcast %295 : i32 to vector<8x1xi32>
    %297 = arith.cmpi sgt, %4, %296 : vector<8x1xi32>
    %298 = arith.extui %297 : vector<8x1xi1> to vector<8x1xi32>
    %299 = arith.sitofp %298 : vector<8x1xi32> to vector<8x1xf32>
    %300 = vector.shape_cast %299 : vector<8x1xf32> to vector<8x1xf32>
    %301 = vector.broadcast %300 : vector<8x1xf32> to vector<8x32xf32>
    %302 = arith.subf %294, %272 : vector<8x32xf32>
    %303 = arith.mulf %301, %302 : vector<8x32xf32>
    %304 = arith.addf %272, %303 : vector<8x32xf32>
    %305 = arith.subf %292, %273 : vector<8x32xf32>
    %306 = arith.mulf %301, %305 : vector<8x32xf32>
    %307 = arith.addf %273, %306 : vector<8x32xf32>
    %c0_90 = arith.constant 0 : index
    %c0_91 = arith.constant 0 : index
    %308 = vector.load %arg10[%c0_90, %c0_91] : memref<8x32xf32, #tpu.memory_space<vmem>>, vector<8x32xf32>
    tpu.vector_store %arg10[%c0_90, %c0_91], %304 {strides = array<i32>} : memref<8x32xf32, #tpu.memory_space<vmem>>, vector<8x32xf32>,
    %c0_92 = arith.constant 0 : index
    %c0_93 = arith.constant 0 : index
    %309 = vector.load %arg11[%c0_92, %c0_93] : memref<8x32xf32, #tpu.memory_space<vmem>>, vector<8x32xf32>
    tpu.vector_store %arg11[%c0_92, %c0_93], %307 {strides = array<i32>} : memref<8x32xf32, #tpu.memory_space<vmem>>, vector<8x32xf32>,
    %310 = arith.mulf %301, %304 : vector<8x32xf32>
    %311 = arith.truncf %310 : vector<8x32xf32> to vector<8x32xbf16>
    %312 = arith.index_cast %271 : i32 to index
    %c0_94 = arith.constant 0 : index
    %313 = vector.load %arg12[%312, %c0_94] : memref<64x32xbf16, #tpu.memory_space<vmem>>, vector<8x32xbf16>
    tpu.vector_store %arg12[%312, %c0_94], %311 {strides = array<i32>} : memref<64x32xbf16, #tpu.memory_space<vmem>>, vector<8x32xbf16>,
    %c7_i32 = arith.constant 7 : i32
    %c8_i32_95 = arith.constant 8 : i32
    %314 = arith.muli %c7_i32, %c8_i32_95 : i32
    %315 = tpu.assume_multiple %314, 8 : i32
    %c0_96 = arith.constant 0 : index
    %c0_97 = arith.constant 0 : index
    %316 = vector.load %arg10[%c0_96, %c0_97] : memref<8x32xf32, #tpu.memory_space<vmem>>, vector<8x32xf32>
    %c0_98 = arith.constant 0 : index
    %c0_99 = arith.constant 0 : index
    %317 = vector.load %arg11[%c0_98, %c0_99] : memref<8x32xf32, #tpu.memory_space<vmem>>, vector<8x32xf32>
    %318 = arith.index_cast %315 : i32 to index
    %c0_100 = arith.constant 0 : index
    %319 = vector.load %arg2[%318, %c0_100] : memref<64x128xf32, #tpu.memory_space<vmem>>, vector<8x128xf32>
    %320 = arith.truncf %316 : vector<8x32xf32> to vector<8x32xbf16>
    %cst_101 = arith.constant dense<0.000000e+00> : vector<8x128xf32>
    %321 = tpu.matmul %320, %3, %cst_101 {dimension_numbers = #tpu.dot_dimension_numbers<[1], [0], [0], [1], [0, 0, 1, 1], [], []>} : vector<8x32xbf16>, vector<32x128xbf16>, vector<8x128xf32> -> vector<8x128xf32>
    %322 = arith.addf %319, %321 : vector<8x128xf32>
    %323 = vector.extract_strided_slice %322 {offsets = [0, 0], sizes = [8, 96], strides = [1, 1]} : vector<8x128xf32> to vector<8x96xf32>
    %324 = arith.negf %323 : vector<8x96xf32>
    %325 = math.exp %324 : vector<8x96xf32>
    %cst_102 = arith.constant 1.000000e+00 : f32
    %326 = vector.broadcast %cst_102 : f32 to vector<8x96xf32>
    %327 = arith.addf %326, %325 : vector<8x96xf32>
    %328 = arith.divf %326, %327 : vector<8x96xf32>
    %329 = vector.extract_strided_slice %322 {offsets = [0, 96], sizes = [8, 32], strides = [1, 1]} : vector<8x128xf32> to vector<8x32xf32>
    %330 = math.tanh %329 : vector<8x32xf32>
    %331 = vector.extract_strided_slice %328 {offsets = [0, 0], sizes = [8, 32], strides = [1, 1]} : vector<8x96xf32> to vector<8x32xf32>
    %332 = vector.extract_strided_slice %328 {offsets = [0, 32], sizes = [8, 32], strides = [1, 1]} : vector<8x96xf32> to vector<8x32xf32>
    %333 = vector.extract_strided_slice %328 {offsets = [0, 64], sizes = [8, 32], strides = [1, 1]} : vector<8x96xf32> to vector<8x32xf32>
    %334 = arith.mulf %332, %317 : vector<8x32xf32>
    %335 = arith.mulf %331, %330 : vector<8x32xf32>
    %336 = arith.addf %334, %335 : vector<8x32xf32>
    %337 = math.tanh %336 : vector<8x32xf32>
    %338 = arith.mulf %333, %337 : vector<8x32xf32>
    %339 = arith.addi %5, %c7_i32 : i32
    %340 = vector.broadcast %339 : i32 to vector<8x1xi32>
    %341 = arith.cmpi sgt, %4, %340 : vector<8x1xi32>
    %342 = arith.extui %341 : vector<8x1xi1> to vector<8x1xi32>
    %343 = arith.sitofp %342 : vector<8x1xi32> to vector<8x1xf32>
    %344 = vector.shape_cast %343 : vector<8x1xf32> to vector<8x1xf32>
    %345 = vector.broadcast %344 : vector<8x1xf32> to vector<8x32xf32>
    %346 = arith.subf %338, %316 : vector<8x32xf32>
    %347 = arith.mulf %345, %346 : vector<8x32xf32>
    %348 = arith.addf %316, %347 : vector<8x32xf32>
    %349 = arith.subf %336, %317 : vector<8x32xf32>
    %350 = arith.mulf %345, %349 : vector<8x32xf32>
    %351 = arith.addf %317, %350 : vector<8x32xf32>
    %c0_103 = arith.constant 0 : index
    %c0_104 = arith.constant 0 : index
    %352 = vector.load %arg10[%c0_103, %c0_104] : memref<8x32xf32, #tpu.memory_space<vmem>>, vector<8x32xf32>
    tpu.vector_store %arg10[%c0_103, %c0_104], %348 {strides = array<i32>} : memref<8x32xf32, #tpu.memory_space<vmem>>, vector<8x32xf32>,
    %c0_105 = arith.constant 0 : index
    %c0_106 = arith.constant 0 : index
    %353 = vector.load %arg11[%c0_105, %c0_106] : memref<8x32xf32, #tpu.memory_space<vmem>>, vector<8x32xf32>
    tpu.vector_store %arg11[%c0_105, %c0_106], %351 {strides = array<i32>} : memref<8x32xf32, #tpu.memory_space<vmem>>, vector<8x32xf32>,
    %354 = arith.mulf %345, %348 : vector<8x32xf32>
    %355 = arith.truncf %354 : vector<8x32xf32> to vector<8x32xbf16>
    %356 = arith.index_cast %315 : i32 to index
    %c0_107 = arith.constant 0 : index
    %357 = vector.load %arg12[%356, %c0_107] : memref<64x32xbf16, #tpu.memory_space<vmem>>, vector<8x32xbf16>
    tpu.vector_store %arg12[%356, %c0_107], %355 {strides = array<i32>} : memref<64x32xbf16, #tpu.memory_space<vmem>>, vector<8x32xbf16>,
    %c8_i32_108 = arith.constant 8 : i32
    %c0_109 = arith.constant 0 : index
    %c0_110 = arith.constant 0 : index
    %358 = vector.load %arg12[%c0_109, %c0_110] : memref<64x32xbf16, #tpu.memory_space<vmem>>, vector<64x32xbf16>
    %c0_111 = arith.constant 0 : index
    %c0_112 = arith.constant 0 : index
    %359 = vector.load %arg4[%c0_111, %c0_112] : memref<32x128xbf16, #tpu.memory_space<vmem>>, vector<32x128xbf16>
    %cst_113 = arith.constant dense<0.000000e+00> : vector<64x128xf32>
    %360 = tpu.matmul %358, %359, %cst_113 {dimension_numbers = #tpu.dot_dimension_numbers<[1], [0], [0], [1], [0, 0, 1, 1], [], []>} : vector<64x32xbf16>, vector<32x128xbf16>, vector<64x128xf32> -> vector<64x128xf32>
    %c0_114 = arith.constant 0 : index
    %c0_115 = arith.constant 0 : index
    %361 = vector.load %arg5[%c0_114, %c0_115] : memref<1x128xf32, #tpu.memory_space<vmem>>, vector<1x128xf32>
    %362 = vector.broadcast %361 : vector<1x128xf32> to vector<64x128xf32>
    %363 = arith.addf %360, %362 : vector<64x128xf32>
    %364 = arith.truncf %363 : vector<64x128xf32> to vector<64x128xbf16>
    %c0_116 = arith.constant 0 : index
    %c0_117 = arith.constant 0 : index
    %365 = vector.load %arg9[%c0_116, %c0_117] : memref<64x128xbf16, #tpu.memory_space<vmem>>, vector<64x128xbf16>
    tpu.vector_store %arg9[%c0_116, %c0_117], %364 {strides = array<i32>} : memref<64x128xbf16, #tpu.memory_space<vmem>>, vector<64x128xbf16>,
    return
  }
  func.func @transform_0(%arg0: i32, %arg1: i32) -> (i32, i32) {
    %c1_i32 = arith.constant 1 : i32
    %0 = arith.muli %arg0, %c1_i32 : i32
    %1 = arith.addi %0, %arg1 : i32
    %c0_i32 = arith.constant 0 : i32
    %c0_i32_0 = arith.constant 0 : i32
    return %1, %c0_i32 : i32, i32
  }
  func.func @transform_1(%arg0: i32, %arg1: i32) -> (i32, i32) {
    %c0_i32 = arith.constant 0 : i32
    %c0_i32_0 = arith.constant 0 : i32
    %c0_i32_1 = arith.constant 0 : i32
    return %c0_i32, %c0_i32_0 : i32, i32
  }
  func.func @transform_2(%arg0: i32, %arg1: i32) -> (i32, i32) {
    %c0_i32 = arith.constant 0 : i32
    %c0_i32_0 = arith.constant 0 : i32
    %c0_i32_1 = arith.constant 0 : i32
    return %c0_i32, %c0_i32_0 : i32, i32
  }
  func.func @transform_3(%arg0: i32, %arg1: i32) -> (i32, i32) {
    %c0_i32 = arith.constant 0 : i32
    %c0_i32_0 = arith.constant 0 : i32
    %c0_i32_1 = arith.constant 0 : i32
    return %c0_i32, %c0_i32_0 : i32, i32
  }
  func.func @transform_4(%arg0: i32, %arg1: i32) -> (i32, i32) {
    %c0_i32 = arith.constant 0 : i32
    %c0_i32_0 = arith.constant 0 : i32
    return %arg0, %c0_i32 : i32, i32
  }
  func.func @transform_5(%arg0: i32, %arg1: i32) -> (i32, i32) {
    %c0_i32 = arith.constant 0 : i32
    %c0_i32_0 = arith.constant 0 : i32
    return %arg0, %c0_i32 : i32, i32
  }
  func.func @transform_6(%arg0: i32, %arg1: i32) -> (i32, i32) {
    %c0_i32 = arith.constant 0 : i32
    %c0_i32_0 = arith.constant 0 : i32
    return %arg0, %c0_i32 : i32, i32
  }
  func.func @transform_7(%arg0: i32, %arg1: i32) -> (i32, i32) {
    %c1_i32 = arith.constant 1 : i32
    %0 = arith.muli %arg0, %c1_i32 : i32
    %1 = arith.addi %0, %arg1 : i32
    %c0_i32 = arith.constant 0 : i32
    %c0_i32_0 = arith.constant 0 : i32
    return %1, %c0_i32 : i32, i32
  }
}

</mosaic_0001>

<llo_original>
// kernel: sxlstm_forward.1
$region0: #{sxlstm_forward.1}
  #allocation0 [shape = 'u32[]', space=smem, size = 0x4, offset = 0x4, fixed_abs, tag = 'smem constant byte address 0x4 - core index']
  #allocation1 [shape = 'u32[72,128]{1,0:T(1,128)}', space=vmem, size = 0x9000, scoped, tag = 'internal scratch']
  #allocation2 [shape = 'f32[8,32]{1,0:T(8,128)}', space=vmem, size = 0x1000, scoped, tag = 'scratch operand']
  #allocation3 [shape = 'f32[8,32]{1,0:T(8,128)}', space=vmem, size = 0x1000, scoped, tag = 'scratch operand']
  #allocation4 [shape = 'bf16[64,32]{1,0:T(8,128)(2,1)}', space=vmem, size = 0x4000, scoped, tag = 'scratch operand']
  %s0 = inlined_call_operand.vmem [shape: f32[64,128], index: 0, kind: input, shape index: {}]
  %s1 = inlined_call_operand.vmem [shape: bf16[32,128], index: 1, kind: input, shape index: {}]
  %s2 = inlined_call_operand.vmem [shape: bf16[32,128], index: 2, kind: input, shape index: {}]
  %s3 = inlined_call_operand.vmem [shape: f32[1,128], index: 3, kind: input, shape index: {}]
  %s4 = inlined_call_operand.vmem [shape: s32[8,1], index: 4, kind: input, shape index: {}]
  %s5 = inlined_call_operand.vmem [shape: f32[8,32], index: 5, kind: input, shape index: {}]
  %s6 = inlined_call_operand.vmem [shape: f32[8,32], index: 6, kind: input, shape index: {}]
  %s7 = inlined_call_operand.vmem [shape: bf16[64,128], index: 7, kind: output, shape index: {}]
  %s8 = sld [smem:[#allocation0]]
  $region42: #{sxlstm_forward.1} parent=0
    _
  %s10 = ssub.s32 1, %s8
  %s11 = scalar_select 0, %s10, %s8
  // Predicated region
  $region2: #{sxlstm_forward.1} parent=0 // pred_check
    _
  $region3: #{sxlstm_forward.1} parent=0 // pred_check_branch
    %13 = sbr.rel (0) target = $region5
  $region4: #{sxlstm_forward.1} parent=0 // pred_region
    %s14 = sadd.s32 0, 0
    %s15 = smul.u32 8, %s14
    %p16 = scmp.lt.s32.totalorder %s15, 7
    %s17 = scalar_select %p16, %s15, 7
    %s18 = smul.addr %s17, 8
    %s19 = scalar_lea.vmem %s0, %s18
    %s20 = sadd.s32 0, 0
    %s21 = smul.u32 8, %s20
  $region5: #{sxlstm_forward.1} parent=0 // pred_fallthru
    _
  // Predicated region
  $region6: #{sxlstm_forward.1} parent=0 // pred_check
    _
  $region7: #{sxlstm_forward.1} parent=0 // pred_check_branch
    %23 = sbr.rel (0) target = $region9
  $region8: #{sxlstm_forward.1} parent=0 // pred_region
    _
  $region9: #{sxlstm_forward.1} parent=0 // pred_fallthru
    _
  // Predicated region
  $region10: #{sxlstm_forward.1} parent=0 // pred_check
    _
  $region11: #{sxlstm_forward.1} parent=0 // pred_check_branch
    %25 = sbr.rel (0) target = $region13
  $region12: #{sxlstm_forward.1} parent=0 // pred_region
    _
  $region13: #{sxlstm_forward.1} parent=0 // pred_fallthru
    _
  // Predicated region
  $region14: #{sxlstm_forward.1} parent=0 // pred_check
    _
  $region15: #{sxlstm_forward.1} parent=0 // pred_check_branch
    %27 = sbr.rel (0) target = $region17
  $region16: #{sxlstm_forward.1} parent=0 // pred_region
    _
  $region17: #{sxlstm_forward.1} parent=0 // pred_fallthru
    _
  // Predicated region
  $region18: #{sxlstm_forward.1} parent=0 // pred_check
    _
  $region19: #{sxlstm_forward.1} parent=0 // pred_check_branch
    %29 = sbr.rel (0) target = $region21
  $region20: #{sxlstm_forward.1} parent=0 // pred_region
    _
  $region21: #{sxlstm_forward.1} parent=0 // pred_fallthru
    _
  // Predicated region
  $region22: #{sxlstm_forward.1} parent=0 // pred_check
    _
  $region23: #{sxlstm_forward.1} parent=0 // pred_check_branch
    %31 = sbr.rel (0) target = $region25
  $region24: #{sxlstm_forward.1} parent=0 // pred_region
    _
  $region25: #{sxlstm_forward.1} parent=0 // pred_fallthru
    _
  // Predicated region
  $region26: #{sxlstm_forward.1} parent=0 // pred_check
    _
  $region27: #{sxlstm_forward.1} parent=0 // pred_check_branch
    %33 = sbr.rel (0) target = $region29
  $region28: #{sxlstm_forward.1} parent=0 // pred_region
    _
  $region29: #{sxlstm_forward.1} parent=0 // pred_fallthru
    _
  %s34 = sadd.s32 0, 0
  %s35 = smul.u32 8, %s34
  %p36 = scmp.lt.s32.totalorder %s35, 7
  %s37 = scalar_select %p36, %s35, 7
  %s38 = smul.addr %s37, 8
  %s39 = scalar_lea.vmem %s0, %s38
  %s40 = sadd.s32 0, 0
  %s41 = smul.u32 8, %s40
  %p42 = scmp.lt.s32.totalorder %s41, 7
  %s43 = scalar_select %p42, %s41, 7
  %s44 = smul.addr %s43, 4
  %s45 = scalar_lea.vmem %s7, %s44
  %s46 = sadd.s32 0, 0
  %s47 = smul.u32 8, %s46
  %p48 = scmp.lt.s32.totalorder %s47, 7
  %s49 = scalar_select %p48, %s47, 7
  %s50 = smul.addr %s49, 8
  %s51 = scalar_lea.vmem %s0, %s50
  %s52 = sadd.s32 0, 0
  %s53 = smul.u32 8, %s52
  %s54 = sadd.s32 0, 0
  %s55 = smul.u32 8, %s54
  %p56 = scmp.lt.s32.totalorder %s55, 7
  %s57 = scalar_select %p56, %s55, 7
  %s58 = smul.addr %s57, 4
  %s59 = scalar_lea.vmem %s7, %s58
  %s60 = sadd.s32 0, 0
  %s61 = smul.u32 8, %s60
  %p63 = scmp.eq.s32.totalorder 0, 0
  // Predicated region
  $region30: #{sxlstm_forward.1} parent=0 // pred_check
    %p64 = pneg %p63
  $region31: #{sxlstm_forward.1} parent=0 // pred_check_branch
    %66 = sbr.rel (%p64) target = $region33
  $region32: #{sxlstm_forward.1} parent=0 // pred_region
    %v67 = vld [vmem:[%s5] sm:$0xff]
    %vm68 = vcmask 261120
    %69 = vst.msk [vmem:[#allocation2] sm:$0xff] %vm68, %v67
    %v70 = vld [vmem:[%s6] sm:$0xff]
    %71 = vst.msk [vmem:[#allocation3] sm:$0xff] %vm68, %v70
  $region33: #{sxlstm_forward.1} parent=0 // pred_fallthru
    _
  %v72 = vld [vmem:[%s1] sm:$0xf]
  %v73 = vld [vmem:[%s1 + $0x4] sm:$0xf]
  %v74 = vld [vmem:[%s1 + $0x8] sm:$0xf]
  %v75 = vld [vmem:[%s1 + $0xc] sm:$0xf]
  %v76 = vld [vmem:[%s4] sm:$0xff]
  %s77 = smul.u32 0, 8
  %v78 = vld [vmem:[#allocation2] sm:$0xff]
  %v79 = vld [vmem:[#allocation3] sm:$0xff]
  %v80 = vld [vmem:[%s51] sm:$0xff]
  %v81 = vpack.c.bf16 %v78, %v78
  %v86 = vunpack.c.l.b16 %v72
  %v87 = vunpack.c.l.b16 %v73
  %v88 = vunpack.c.l.b16 %v74
  %v89 = vunpack.c.l.b16 %v75
  %v90 = vpack.c.b16 %v87, %v86
  %v91 = vpack.c.b16 %v89, %v88
  %vm94 = vcmask 261120
  %v96 = vsel %vm94, %v81, 0
  %98 = vmatpush.bf16.msra.mxu0 0
  %99 = vmatpush.bf16.msra.mxu0 0
  %100 = vmatpush.bf16.msra.mxu0 0
  %101 = vmatpush.bf16.msra.mxu0 0
  %102 = vmatpush.bf16.msra.mxu0 0
  %103 = vmatpush.bf16.msra.mxu0 0
  %104 = vmatpush.bf16.msra.mxu0 %v91
  %105 = vmatpush.bf16.msra.mxu0 %v90
  %106 = vmatmul.bf16.gmra.mxu0 %v96
  %v107 = vpop.f32.mrf.mxu0
  %v108 = vadd.f32 0.0, %v107
  %v109 = vpop.f32.mrf.mxu0
  %110 = vdwg.mxu0
  %v111 = vadd.f32 %v80, %v108
  %v112 = vxor.u32 %v111, 2147483648
  %v113 = vmul.f32 %v112, 1.442695
  %v114 = vpow.pop %v113
  %v115 = vadd.f32 %v114, 1.0
  %v116 = vrcp.pop %v115
  %v117 = vmul.f32 %v115, %v116
  %v118 = vsub.f32 1.0, %v117
  %v119 = vmul.f32 %v116, %v118
  %v120 = vadd.f32 %v116, %v119
  %vm121 = vweird.f32 %v115
  %vm122 = vweird.f32 %v116
  %vm123 = vmor %vm121, %vm122
  %v124 = vsel %vm123, %v116, %v120
  %v125 = vand.u32 2147483647, %v115
  %vm126 = vcmp.eq.f32.partialorder %v125, 8.507059e+37
  %v127 = vand.u32 %v115, 2147483648
  %v128 = vor.u32 1.1754944e-38, %v127
  %v129 = vsel %vm126, %v128, %v124
  %v130 = vmul.f32 1.0, %v129
  %v131 = vtanh.pop %v111
  %133 = vrot.lane.b32.xlu0 %v79, 32
  %v134 = vpop.permute.xlu0 %133
  %v136 = vmul.f32 %v130, %v134
  %138 = vrot.lane.b32.xlu0 %v131, 32
  %v139 = vpop.permute.xlu0 %138
  %v141 = vmul.f32 %v130, %v139
  %143 = vrot.lane.b32.xlu0 %v141, 32
  %v144 = vpop.permute.xlu0 %143
  %v146 = vadd.f32 %v136, %v144
  %v147 = vtanh.pop %v146
  %149 = vrot.lane.b32.xlu0 %v147, 32
  %v150 = vpop.permute.xlu0 %149
  %v152 = vmul.f32 %v130, %v150
  %v153 = vstv %s77
  %vm154 = vcmp.gt.s32.totalorder %v76, %v153
  %v155 = vsel %vm154, 1, 0
  %v156 = vcvt.s32.f32 %v155
  %158 = vset.pattern.permute.xlu0 0
  %159 = vperm.xlu0 %158, %v156
  %v160 = vpop.permute.xlu0 %159
  %163 = vrot.lane.b32.xlu0 %v78, 64
  %v164 = vpop.permute.xlu0 %163
  %v166 = vsub.f32 %v152, %v164
  %v167 = vmul.f32 %v160, %v166
  %169 = vrot.lane.b32.xlu0 %v167, 64
  %v170 = vpop.permute.xlu0 %169
  %v172 = vadd.f32 %v78, %v170
  %v173 = vsub.f32 %v146, %v134
  %v174 = vmul.f32 %v160, %v173
  %176 = vrot.lane.b32.xlu0 %v174, 96
  %v177 = vpop.permute.xlu0 %176
  %v179 = vadd.f32 %v79, %v177
  %180 = vst.msk [vmem:[#allocation2] sm:$0xff] %vm94, %v172
  %181 = vst.msk [vmem:[#allocation3] sm:$0xff] %vm94, %v179
  %v182 = vmul.f32 %v160, %v172
  %v183 = vpack.c.bf16 %v182, %v182
  %vm184 = vcmask 257024
  %185 = vst.msk [vmem:[#allocation4] sm:$0xf] %vm184, %v183
  %v186 = vld [vmem:[#allocation2] sm:$0xff]
  %v187 = vld [vmem:[#allocation3] sm:$0xff]
  %s188 = scalar_lea.vmem %s51, 8
  %v189 = vld [vmem:[%s188] sm:$0xff]
  %v190 = vpack.c.bf16 %v186, %v186
  %v192 = vsel %vm94, %v190, 0
  %194 = vmatpush.bf16.msra.mxu0 0
  %195 = vmatpush.bf16.msra.mxu0 0
  %196 = vmatpush.bf16.msra.mxu0 0
  %197 = vmatpush.bf16.msra.mxu0 0
  %198 = vmatpush.bf16.msra.mxu0 0
  %199 = vmatpush.bf16.msra.mxu0 0
  %200 = vmatpush.bf16.msra.mxu0 %v91
  %201 = vmatpush.bf16.msra.mxu0 %v90
  %202 = vmatmul.bf16.gmra.mxu0 %v192
  %v203 = vpop.f32.mrf.mxu0
  %v204 = vadd.f32 0.0, %v203
  %v205 = vpop.f32.mrf.mxu0
  %206 = vdwg.mxu0
  %v207 = vadd.f32 %v189, %v204
  %v208 = vxor.u32 %v207, 2147483648
  %v209 = vmul.f32 %v208, 1.442695
  %v210 = vpow.pop %v209
  %v211 = vadd.f32 %v210, 1.0
  %v212 = vrcp.pop %v211
  %v213 = vmul.f32 %v211, %v212
  %v214 = vsub.f32 1.0, %v213
  %v215 = vmul.f32 %v212, %v214
  %v216 = vadd.f32 %v212, %v215
  %vm217 = vweird.f32 %v211
  %vm218 = vweird.f32 %v212
  %vm219 = vmor %vm217, %vm218
  %v220 = vsel %vm219, %v212, %v216
  %v221 = vand.u32 2147483647, %v211
  %vm222 = vcmp.eq.f32.partialorder %v221, 8.507059e+37
  %v223 = vand.u32 %v211, 2147483648
  %v224 = vor.u32 1.1754944e-38, %v223
  %v225 = vsel %vm222, %v224, %v220
  %v226 = vmul.f32 1.0, %v225
  %v227 = vtanh.pop %v207
  %229 = vrot.lane.b32.xlu0 %v187, 32
  %v230 = vpop.permute.xlu0 %229
  %v232 = vmul.f32 %v226, %v230
  %234 = vrot.lane.b32.xlu0 %v227, 32
  %v235 = vpop.permute.xlu0 %234
  %v237 = vmul.f32 %v226, %v235
  %239 = vrot.lane.b32.xlu0 %v237, 32
  %v240 = vpop.permute.xlu0 %239
  %v242 = vadd.f32 %v232, %v240
  %v243 = vtanh.pop %v242
  %245 = vrot.lane.b32.xlu0 %v243, 32
  %v246 = vpop.permute.xlu0 %245
  %v248 = vmul.f32 %v226, %v246
  %s249 = sadd.s32 %s77, 1
  %v250 = vstv %s249
  %vm251 = vcmp.gt.s32.totalorder %v76, %v250
  %v252 = vsel %vm251, 1, 0
  %v253 = vcvt.s32.f32 %v252
  %255 = vset.pattern.permute.xlu0 0
  %256 = vperm.xlu0 %255, %v253
  %v257 = vpop.permute.xlu0 %256
  %260 = vrot.lane.b32.xlu0 %v186, 64
  %v261 = vpop.permute.xlu0 %260
  %v263 = vsub.f32 %v248, %v261
  %v264 = vmul.f32 %v257, %v263
  %266 = vrot.lane.b32.xlu0 %v264, 64
  %v267 = vpop.permute.xlu0 %266
  %v269 = vadd.f32 %v186, %v267
  %v270 = vsub.f32 %v242, %v230
  %v271 = vmul.f32 %v257, %v270
  %273 = vrot.lane.b32.xlu0 %v271, 96
  %v274 = vpop.permute.xlu0 %273
  %v276 = vadd.f32 %v187, %v274
  %277 = vst.msk [vmem:[#allocation2] sm:$0xff] %vm94, %v269
  %278 = vst.msk [vmem:[#allocation3] sm:$0xff] %vm94, %v276
  %v279 = vmul.f32 %v257, %v269
  %v280 = vpack.c.bf16 %v279, %v279
  %s281 = scalar_lea.vmem [#allocation4], 4
  %282 = vst.msk [vmem:[%s281] sm:$0xf] %vm184, %v280
  %v283 = vld [vmem:[#allocation2] sm:$0xff]
  %v284 = vld [vmem:[#allocation3] sm:$0xff]
  %s285 = scalar_lea.vmem %s51, 16
  %v286 = vld [vmem:[%s285] sm:$0xff]
  %v287 = vpack.c.bf16 %v283, %v283
  %v289 = vsel %vm94, %v287, 0
  %291 = vmatpush.bf16.msra.mxu0 0
  %292 = vmatpush.bf16.msra.mxu0 0
  %293 = vmatpush.bf16.msra.mxu0 0
  %294 = vmatpush.bf16.msra.mxu0 0
  %295 = vmatpush.bf16.msra.mxu0 0
  %296 = vmatpush.bf16.msra.mxu0 0
  %297 = vmatpush.bf16.msra.mxu0 %v91
  %298 = vmatpush.bf16.msra.mxu0 %v90
  %299 = vmatmul.bf16.gmra.mxu0 %v289
  %v300 = vpop.f32.mrf.mxu0
  %v301 = vadd.f32 0.0, %v300
  %v302 = vpop.f32.mrf.mxu0
  %303 = vdwg.mxu0
  %v304 = vadd.f32 %v286, %v301
  %v305 = vxor.u32 %v304, 2147483648
  %v306 = vmul.f32 %v305, 1.442695
  %v307 = vpow.pop %v306
  %v308 = vadd.f32 %v307, 1.0
  %v309 = vrcp.pop %v308
  %v310 = vmul.f32 %v308, %v309
  %v311 = vsub.f32 1.0, %v310
  %v312 = vmul.f32 %v309, %v311
  %v313 = vadd.f32 %v309, %v312
  %vm314 = vweird.f32 %v308
  %vm315 = vweird.f32 %v309
  %vm316 = vmor %vm314, %vm315
  %v317 = vsel %vm316, %v309, %v313
  %v318 = vand.u32 2147483647, %v308
  %vm319 = vcmp.eq.f32.partialorder %v318, 8.507059e+37
  %v320 = vand.u32 %v308, 2147483648
  %v321 = vor.u32 1.1754944e-38, %v320
  %v322 = vsel %vm319, %v321, %v317
  %v323 = vmul.f32 1.0, %v322
  %v324 = vtanh.pop %v304
  %326 = vrot.lane.b32.xlu0 %v284, 32
  %v327 = vpop.permute.xlu0 %326
  %v329 = vmul.f32 %v323, %v327
  %331 = vrot.lane.b32.xlu0 %v324, 32
  %v332 = vpop.permute.xlu0 %331
  %v334 = vmul.f32 %v323, %v332
  %336 = vrot.lane.b32.xlu0 %v334, 32
  %v337 = vpop.permute.xlu0 %336
  %v339 = vadd.f32 %v329, %v337
  %v340 = vtanh.pop %v339
  %342 = vrot.lane.b32.xlu0 %v340, 32
  %v343 = vpop.permute.xlu0 %342
  %v345 = vmul.f32 %v323, %v343
  %s346 = sadd.s32 %s77, 2
  %v347 = vstv %s346
  %vm348 = vcmp.gt.s32.totalorder %v76, %v347
  %v349 = vsel %vm348, 1, 0
  %v350 = vcvt.s32.f32 %v349
  %352 = vset.pattern.permute.xlu0 0
  %353 = vperm.xlu0 %352, %v350
  %v354 = vpop.permute.xlu0 %353
  %357 = vrot.lane.b32.xlu0 %v283, 64
  %v358 = vpop.permute.xlu0 %357
  %v360 = vsub.f32 %v345, %v358
  %v361 = vmul.f32 %v354, %v360
  %363 = vrot.lane.b32.xlu0 %v361, 64
  %v364 = vpop.permute.xlu0 %363
  %v366 = vadd.f32 %v283, %v364
  %v367 = vsub.f32 %v339, %v327
  %v368 = vmul.f32 %v354, %v367
  %370 = vrot.lane.b32.xlu0 %v368, 96
  %v371 = vpop.permute.xlu0 %370
  %v373 = vadd.f32 %v284, %v371
  %374 = vst.msk [vmem:[#allocation2] sm:$0xff] %vm94, %v366
  %375 = vst.msk [vmem:[#allocation3] sm:$0xff] %vm94, %v373
  %v376 = vmul.f32 %v354, %v366
  %v377 = vpack.c.bf16 %v376, %v376
  %s378 = scalar_lea.vmem [#allocation4], 8
  %379 = vst.msk [vmem:[%s378] sm:$0xf] %vm184, %v377
  %v380 = vld [vmem:[#allocation2] sm:$0xff]
  %v381 = vld [vmem:[#allocation3] sm:$0xff]
  %s382 = scalar_lea.vmem %s51, 24
  %v383 = vld [vmem:[%s382] sm:$0xff]
  %v384 = vpack.c.bf16 %v380, %v380
  %v386 = vsel %vm94, %v384, 0
  %388 = vmatpush.bf16.msra.mxu0 0
  %389 = vmatpush.bf16.msra.mxu0 0
  %390 = vmatpush.bf16.msra.mxu0 0
  %391 = vmatpush.bf16.msra.mxu0 0
  %392 = vmatpush.bf16.msra.mxu0 0
  %393 = vmatpush.bf16.msra.mxu0 0
  %394 = vmatpush.bf16.msra.mxu0 %v91
  %395 = vmatpush.bf16.msra.mxu0 %v90
  %396 = vmatmul.bf16.gmra.mxu0 %v386
  %v397 = vpop.f32.mrf.mxu0
  %v398 = vadd.f32 0.0, %v397
  %v399 = vpop.f32.mrf.mxu0
  %400 = vdwg.mxu0
  %v401 = vadd.f32 %v383, %v398
  %v402 = vxor.u32 %v401, 2147483648
  %v403 = vmul.f32 %v402, 1.442695
  %v404 = vpow.pop %v403
  %v405 = vadd.f32 %v404, 1.0
  %v406 = vrcp.pop %v405
  %v407 = vmul.f32 %v405, %v406
  %v408 = vsub.f32 1.0, %v407
  %v409 = vmul.f32 %v406, %v408
  %v410 = vadd.f32 %v406, %v409
  %vm411 = vweird.f32 %v405
  %vm412 = vweird.f32 %v406
  %vm413 = vmor %vm411, %vm412
  %v414 = vsel %vm413, %v406, %v410
  %v415 = vand.u32 2147483647, %v405
  %vm416 = vcmp.eq.f32.partialorder %v415, 8.507059e+37
  %v417 = vand.u32 %v405, 2147483648
  %v418 = vor.u32 1.1754944e-38, %v417
  %v419 = vsel %vm416, %v418, %v414
  %v420 = vmul.f32 1.0, %v419
  %v421 = vtanh.pop %v401
  %423 = vrot.lane.b32.xlu0 %v381, 32
  %v424 = vpop.permute.xlu0 %423
  %v426 = vmul.f32 %v420, %v424
  %428 = vrot.lane.b32.xlu0 %v421, 32
  %v429 = vpop.permute.xlu0 %428
  %v431 = vmul.f32 %v420, %v429
  %433 = vrot.lane.b32.xlu0 %v431, 32
  %v434 = vpop.permute.xlu0 %433
  %v436 = vadd.f32 %v426, %v434
  %v437 = vtanh.pop %v436
  %439 = vrot.lane.b32.xlu0 %v437, 32
  %v440 = vpop.permute.xlu0 %439
  %v442 = vmul.f32 %v420, %v440
  %s443 = sadd.s32 %s77, 3
  %v444 = vstv %s443
  %vm445 = vcmp.gt.s32.totalorder %v76, %v444
  %v446 = vsel %vm445, 1, 0
  %v447 = vcvt.s32.f32 %v446
  %449 = vset.pattern.permute.xlu0 0
  %450 = vperm.xlu0 %449, %v447
  %v451 = vpop.permute.xlu0 %450
  %454 = vrot.lane.b32.xlu0 %v380, 64
  %v455 = vpop.permute.xlu0 %454
  %v457 = vsub.f32 %v442, %v455
  %v458 = vmul.f32 %v451, %v457
  %460 = vrot.lane.b32.xlu0 %v458, 64
  %v461 = vpop.permute.xlu0 %460
  %v463 = vadd.f32 %v380, %v461
  %v464 = vsub.f32 %v436, %v424
  %v465 = vmul.f32 %v451, %v464
  %467 = vrot.lane.b32.xlu0 %v465, 96
  %v468 = vpop.permute.xlu0 %467
  %v470 = vadd.f32 %v381, %v468
  %471 = vst.msk [vmem:[#allocation2] sm:$0xff] %vm94, %v463
  %472 = vst.msk [vmem:[#allocation3] sm:$0xff] %vm94, %v470
  %v473 = vmul.f32 %v451, %v463
  %v474 = vpack.c.bf16 %v473, %v473
  %s475 = scalar_lea.vmem [#allocation4], 12
  %476 = vst.msk [vmem:[%s475] sm:$0xf] %vm184, %v474
  %v477 = vld [vmem:[#allocation2] sm:$0xff]
  %v478 = vld [vmem:[#allocation3] sm:$0xff]
  %s479 = scalar_lea.vmem %s51, 32
  %v480 = vld [vmem:[%s479] sm:$0xff]
  %v481 = vpack.c.bf16 %v477, %v477
  %v483 = vsel %vm94, %v481, 0
  %485 = vmatpush.bf16.msra.mxu0 0
  %486 = vmatpush.bf16.msra.mxu0 0
  %487 = vmatpush.bf16.msra.mxu0 0
  %488 = vmatpush.bf16.msra.mxu0 0
  %489 = vmatpush.bf16.msra.mxu0 0
  %490 = vmatpush.bf16.msra.mxu0 0
  %491 = vmatpush.bf16.msra.mxu0 %v91
  %492 = vmatpush.bf16.msra.mxu0 %v90
  %493 = vmatmul.bf16.gmra.mxu0 %v483
  %v494 = vpop.f32.mrf.mxu0
  %v495 = vadd.f32 0.0, %v494
  %v496 = vpop.f32.mrf.mxu0
  %497 = vdwg.mxu0
  %v498 = vadd.f32 %v480, %v495
  %v499 = vxor.u32 %v498, 2147483648
  %v500 = vmul.f32 %v499, 1.442695
  %v501 = vpow.pop %v500
  %v502 = vadd.f32 %v501, 1.0
  %v503 = vrcp.pop %v502
  %v504 = vmul.f32 %v502, %v503
  %v505 = vsub.f32 1.0, %v504
  %v506 = vmul.f32 %v503, %v505
  %v507 = vadd.f32 %v503, %v506
  %vm508 = vweird.f32 %v502
  %vm509 = vweird.f32 %v503
  %vm510 = vmor %vm508, %vm509
  %v511 = vsel %vm510, %v503, %v507
  %v512 = vand.u32 2147483647, %v502
  %vm513 = vcmp.eq.f32.partialorder %v512, 8.507059e+37
  %v514 = vand.u32 %v502, 2147483648
  %v515 = vor.u32 1.1754944e-38, %v514
  %v516 = vsel %vm513, %v515, %v511
  %v517 = vmul.f32 1.0, %v516
  %v518 = vtanh.pop %v498
  %520 = vrot.lane.b32.xlu0 %v478, 32
  %v521 = vpop.permute.xlu0 %520
  %v523 = vmul.f32 %v517, %v521
  %525 = vrot.lane.b32.xlu0 %v518, 32
  %v526 = vpop.permute.xlu0 %525
  %v528 = vmul.f32 %v517, %v526
  %530 = vrot.lane.b32.xlu0 %v528, 32
  %v531 = vpop.permute.xlu0 %530
  %v533 = vadd.f32 %v523, %v531
  %v534 = vtanh.pop %v533
  %536 = vrot.lane.b32.xlu0 %v534, 32
  %v537 = vpop.permute.xlu0 %536
  %v539 = vmul.f32 %v517, %v537
  %s540 = sadd.s32 %s77, 4
  %v541 = vstv %s540
  %vm542 = vcmp.gt.s32.totalorder %v76, %v541
  %v543 = vsel %vm542, 1, 0
  %v544 = vcvt.s32.f32 %v543
  %546 = vset.pattern.permute.xlu0 0
  %547 = vperm.xlu0 %546, %v544
  %v548 = vpop.permute.xlu0 %547
  %551 = vrot.lane.b32.xlu0 %v477, 64
  %v552 = vpop.permute.xlu0 %551
  %v554 = vsub.f32 %v539, %v552
  %v555 = vmul.f32 %v548, %v554
  %557 = vrot.lane.b32.xlu0 %v555, 64
  %v558 = vpop.permute.xlu0 %557
  %v560 = vadd.f32 %v477, %v558
  %v561 = vsub.f32 %v533, %v521
  %v562 = vmul.f32 %v548, %v561
  %564 = vrot.lane.b32.xlu0 %v562, 96
  %v565 = vpop.permute.xlu0 %564
  %v567 = vadd.f32 %v478, %v565
  %568 = vst.msk [vmem:[#allocation2] sm:$0xff] %vm94, %v560
  %569 = vst.msk [vmem:[#allocation3] sm:$0xff] %vm94, %v567
  %v570 = vmul.f32 %v548, %v560
  %v571 = vpack.c.bf16 %v570, %v570
  %s572 = scalar_lea.vmem [#allocation4], 16
  %573 = vst.msk [vmem:[%s572] sm:$0xf] %vm184, %v571
  %v574 = vld [vmem:[#allocation2] sm:$0xff]
  %v575 = vld [vmem:[#allocation3] sm:$0xff]
  %s576 = scalar_lea.vmem %s51, 40
  %v577 = vld [vmem:[%s576] sm:$0xff]
  %v578 = vpack.c.bf16 %v574, %v574
  %v580 = vsel %vm94, %v578, 0
  %582 = vmatpush.bf16.msra.mxu0 0
  %583 = vmatpush.bf16.msra.mxu0 0
  %584 = vmatpush.bf16.msra.mxu0 0
  %585 = vmatpush.bf16.msra.mxu0 0
  %586 = vmatpush.bf16.msra.mxu0 0
  %587 = vmatpush.bf16.msra.mxu0 0
  %588 = vmatpush.bf16.msra.mxu0 %v91
  %589 = vmatpush.bf16.msra.mxu0 %v90
  %590 = vmatmul.bf16.gmra.mxu0 %v580
  %v591 = vpop.f32.mrf.mxu0
  %v592 = vadd.f32 0.0, %v591
  %v593 = vpop.f32.mrf.mxu0
  %594 = vdwg.mxu0
  %v595 = vadd.f32 %v577, %v592
  %v596 = vxor.u32 %v595, 2147483648
  %v597 = vmul.f32 %v596, 1.442695
  %v598 = vpow.pop %v597
  %v599 = vadd.f32 %v598, 1.0
  %v600 = vrcp.pop %v599
  %v601 = vmul.f32 %v599, %v600
  %v602 = vsub.f32 1.0, %v601
  %v603 = vmul.f32 %v600, %v602
  %v604 = vadd.f32 %v600, %v603
  %vm605 = vweird.f32 %v599
  %vm606 = vweird.f32 %v600
  %vm607 = vmor %vm605, %vm606
  %v608 = vsel %vm607, %v600, %v604
  %v609 = vand.u32 2147483647, %v599
  %vm610 = vcmp.eq.f32.partialorder %v609, 8.507059e+37
  %v611 = vand.u32 %v599, 2147483648
  %v612 = vor.u32 1.1754944e-38, %v611
  %v613 = vsel %vm610, %v612, %v608
  %v614 = vmul.f32 1.0, %v613
  %v615 = vtanh.pop %v595
  %617 = vrot.lane.b32.xlu0 %v575, 32
  %v618 = vpop.permute.xlu0 %617
  %v620 = vmul.f32 %v614, %v618
  %622 = vrot.lane.b32.xlu0 %v615, 32
  %v623 = vpop.permute.xlu0 %622
  %v625 = vmul.f32 %v614, %v623
  %627 = vrot.lane.b32.xlu0 %v625, 32
  %v628 = vpop.permute.xlu0 %627
  %v630 = vadd.f32 %v620, %v628
  %v631 = vtanh.pop %v630
  %633 = vrot.lane.b32.xlu0 %v631, 32
  %v634 = vpop.permute.xlu0 %633
  %v636 = vmul.f32 %v614, %v634
  %s637 = sadd.s32 %s77, 5
  %v638 = vstv %s637
  %vm639 = vcmp.gt.s32.totalorder %v76, %v638
  %v640 = vsel %vm639, 1, 0
  %v641 = vcvt.s32.f32 %v640
  %643 = vset.pattern.permute.xlu0 0
  %644 = vperm.xlu0 %643, %v641
  %v645 = vpop.permute.xlu0 %644
  %648 = vrot.lane.b32.xlu0 %v574, 64
  %v649 = vpop.permute.xlu0 %648
  %v651 = vsub.f32 %v636, %v649
  %v652 = vmul.f32 %v645, %v651
  %654 = vrot.lane.b32.xlu0 %v652, 64
  %v655 = vpop.permute.xlu0 %654
  %v657 = vadd.f32 %v574, %v655
  %v658 = vsub.f32 %v630, %v618
  %v659 = vmul.f32 %v645, %v658
  %661 = vrot.lane.b32.xlu0 %v659, 96
  %v662 = vpop.permute.xlu0 %661
  %v664 = vadd.f32 %v575, %v662
  %665 = vst.msk [vmem:[#allocation2] sm:$0xff] %vm94, %v657
  %666 = vst.msk [vmem:[#allocation3] sm:$0xff] %vm94, %v664
  %v667 = vmul.f32 %v645, %v657
  %v668 = vpack.c.bf16 %v667, %v667
  %s669 = scalar_lea.vmem [#allocation4], 20
  %670 = vst.msk [vmem:[%s669] sm:$0xf] %vm184, %v668
  %v671 = vld [vmem:[#allocation2] sm:$0xff]
  %v672 = vld [vmem:[#allocation3] sm:$0xff]
  %s673 = scalar_lea.vmem %s51, 48
  %v674 = vld [vmem:[%s673] sm:$0xff]
  %v675 = vpack.c.bf16 %v671, %v671
  %v677 = vsel %vm94, %v675, 0
  %679 = vmatpush.bf16.msra.mxu0 0
  %680 = vmatpush.bf16.msra.mxu0 0
  %681 = vmatpush.bf16.msra.mxu0 0
  %682 = vmatpush.bf16.msra.mxu0 0
  %683 = vmatpush.bf16.msra.mxu0 0
  %684 = vmatpush.bf16.msra.mxu0 0
  %685 = vmatpush.bf16.msra.mxu0 %v91
  %686 = vmatpush.bf16.msra.mxu0 %v90
  %687 = vmatmul.bf16.gmra.mxu0 %v677
  %v688 = vpop.f32.mrf.mxu0
  %v689 = vadd.f32 0.0, %v688
  %v690 = vpop.f32.mrf.mxu0
  %691 = vdwg.mxu0
  %v692 = vadd.f32 %v674, %v689
  %v693 = vxor.u32 %v692, 2147483648
  %v694 = vmul.f32 %v693, 1.442695
  %v695 = vpow.pop %v694
  %v696 = vadd.f32 %v695, 1.0
  %v697 = vrcp.pop %v696
  %v698 = vmul.f32 %v696, %v697
  %v699 = vsub.f32 1.0, %v698
  %v700 = vmul.f32 %v697, %v699
  %v701 = vadd.f32 %v697, %v700
  %vm702 = vweird.f32 %v696
  %vm703 = vweird.f32 %v697
  %vm704 = vmor %vm702, %vm703
  %v705 = vsel %vm704, %v697, %v701
  %v706 = vand.u32 2147483647, %v696
  %vm707 = vcmp.eq.f32.partialorder %v706, 8.507059e+37
  %v708 = vand.u32 %v696, 2147483648
  %v709 = vor.u32 1.1754944e-38, %v708
  %v710 = vsel %vm707, %v709, %v705
  %v711 = vmul.f32 1.0, %v710
  %v712 = vtanh.pop %v692
  %714 = vrot.lane.b32.xlu0 %v672, 32
  %v715 = vpop.permute.xlu0 %714
  %v717 = vmul.f32 %v711, %v715
  %719 = vrot.lane.b32.xlu0 %v712, 32
  %v720 = vpop.permute.xlu0 %719
  %v722 = vmul.f32 %v711, %v720
  %724 = vrot.lane.b32.xlu0 %v722, 32
  %v725 = vpop.permute.xlu0 %724
  %v727 = vadd.f32 %v717, %v725
  %v728 = vtanh.pop %v727
  %730 = vrot.lane.b32.xlu0 %v728, 32
  %v731 = vpop.permute.xlu0 %730
  %v733 = vmul.f32 %v711, %v731
  %s734 = sadd.s32 %s77, 6
  %v735 = vstv %s734
  %vm736 = vcmp.gt.s32.totalorder %v76, %v735
  %v737 = vsel %vm736, 1, 0
  %v738 = vcvt.s32.f32 %v737
  %740 = vset.pattern.permute.xlu0 0
  %741 = vperm.xlu0 %740, %v738
  %v742 = vpop.permute.xlu0 %741
  %745 = vrot.lane.b32.xlu0 %v671, 64
  %v746 = vpop.permute.xlu0 %745
  %v748 = vsub.f32 %v733, %v746
  %v749 = vmul.f32 %v742, %v748
  %751 = vrot.lane.b32.xlu0 %v749, 64
  %v752 = vpop.permute.xlu0 %751
  %v754 = vadd.f32 %v671, %v752
  %v755 = vsub.f32 %v727, %v715
  %v756 = vmul.f32 %v742, %v755
  %758 = vrot.lane.b32.xlu0 %v756, 96
  %v759 = vpop.permute.xlu0 %758
  %v761 = vadd.f32 %v672, %v759
  %762 = vst.msk [vmem:[#allocation2] sm:$0xff] %vm94, %v754
  %763 = vst.msk [vmem:[#allocation3] sm:$0xff] %vm94, %v761
  %v764 = vmul.f32 %v742, %v754
  %v765 = vpack.c.bf16 %v764, %v764
  %s766 = scalar_lea.vmem [#allocation4], 24
  %767 = vst.msk [vmem:[%s766] sm:$0xf] %vm184, %v765
  %v768 = vld [vmem:[#allocation2] sm:$0xff]
  %v769 = vld [vmem:[#allocation3] sm:$0xff]
  %s770 = scalar_lea.vmem %s51, 56
  %v771 = vld [vmem:[%s770] sm:$0xff]
  %v772 = vpack.c.bf16 %v768, %v768
  %v774 = vsel %vm94, %v772, 0
  %776 = vmatpush.bf16.msra.mxu0 0
  %777 = vmatpush.bf16.msra.mxu0 0
  %778 = vmatpush.bf16.msra.mxu0 0
  %779 = vmatpush.bf16.msra.mxu0 0
  %780 = vmatpush.bf16.msra.mxu0 0
  %781 = vmatpush.bf16.msra.mxu0 0
  %782 = vmatpush.bf16.msra.mxu0 %v91
  %783 = vmatpush.bf16.msra.mxu0 %v90
  %784 = vmatmul.bf16.gmra.mxu0 %v774
  %v785 = vpop.f32.mrf.mxu0
  %v786 = vadd.f32 0.0, %v785
  %v787 = vpop.f32.mrf.mxu0
  %788 = vdwg.mxu0
  %v789 = vadd.f32 %v771, %v786
  %v790 = vxor.u32 %v789, 2147483648
  %v791 = vmul.f32 %v790, 1.442695
  %v792 = vpow.pop %v791
  %v793 = vadd.f32 %v792, 1.0
  %v794 = vrcp.pop %v793
  %v795 = vmul.f32 %v793, %v794
  %v796 = vsub.f32 1.0, %v795
  %v797 = vmul.f32 %v794, %v796
  %v798 = vadd.f32 %v794, %v797
  %vm799 = vweird.f32 %v793
  %vm800 = vweird.f32 %v794
  %vm801 = vmor %vm799, %vm800
  %v802 = vsel %vm801, %v794, %v798
  %v803 = vand.u32 2147483647, %v793
  %vm804 = vcmp.eq.f32.partialorder %v803, 8.507059e+37
  %v805 = vand.u32 %v793, 2147483648
  %v806 = vor.u32 1.1754944e-38, %v805
  %v807 = vsel %vm804, %v806, %v802
  %v808 = vmul.f32 1.0, %v807
  %v809 = vtanh.pop %v789
  %811 = vrot.lane.b32.xlu0 %v769, 32
  %v812 = vpop.permute.xlu0 %811
  %v814 = vmul.f32 %v808, %v812
  %816 = vrot.lane.b32.xlu0 %v809, 32
  %v817 = vpop.permute.xlu0 %816
  %v819 = vmul.f32 %v808, %v817
  %821 = vrot.lane.b32.xlu0 %v819, 32
  %v822 = vpop.permute.xlu0 %821
  %v824 = vadd.f32 %v814, %v822
  %v825 = vtanh.pop %v824
  %827 = vrot.lane.b32.xlu0 %v825, 32
  %v828 = vpop.permute.xlu0 %827
  %v830 = vmul.f32 %v808, %v828
  %s831 = sadd.s32 %s77, 7
  %v832 = vstv %s831
  %vm833 = vcmp.gt.s32.totalorder %v76, %v832
  %v834 = vsel %vm833, 1, 0
  %v835 = vcvt.s32.f32 %v834
  %837 = vset.pattern.permute.xlu0 0
  %838 = vperm.xlu0 %837, %v835
  %v839 = vpop.permute.xlu0 %838
  %842 = vrot.lane.b32.xlu0 %v768, 64
  %v843 = vpop.permute.xlu0 %842
  %v845 = vsub.f32 %v830, %v843
  %v846 = vmul.f32 %v839, %v845
  %848 = vrot.lane.b32.xlu0 %v846, 64
  %v849 = vpop.permute.xlu0 %848
  %v851 = vadd.f32 %v768, %v849
  %v852 = vsub.f32 %v824, %v812
  %v853 = vmul.f32 %v839, %v852
  %855 = vrot.lane.b32.xlu0 %v853, 96
  %v856 = vpop.permute.xlu0 %855
  %v858 = vadd.f32 %v769, %v856
  %859 = vst.msk [vmem:[#allocation2] sm:$0xff] %vm94, %v851
  %860 = vst.msk [vmem:[#allocation3] sm:$0xff] %vm94, %v858
  %v861 = vmul.f32 %v839, %v851
  %v862 = vpack.c.bf16 %v861, %v861
  %s863 = scalar_lea.vmem [#allocation4], 28
  %864 = vst.msk [vmem:[%s863] sm:$0xf] %vm184, %v862
  %v865 = vld [vmem:[#allocation4] sm:$0xf]
  %v866 = vld [vmem:[#allocation4 + $0x4] sm:$0xf]
  %v867 = vld [vmem:[#allocation4 + $0x8] sm:$0xf]
  %v868 = vld [vmem:[#allocation4 + $0xc] sm:$0xf]
  %v869 = vld [vmem:[#allocation4 + $0x10] sm:$0xf]
  %v870 = vld [vmem:[#allocation4 + $0x14] sm:$0xf]
  %v871 = vld [vmem:[#allocation4 + $0x18] sm:$0xf]
  %v872 = vld [vmem:[#allocation4 + $0x1c] sm:$0xf]
  %v873 = vld [vmem:[%s2] sm:$0xf]
  %v874 = vld [vmem:[%s2 + $0x4] sm:$0xf]
  %v875 = vld [vmem:[%s2 + $0x8] sm:$0xf]
  %v876 = vld [vmem:[%s2 + $0xc] sm:$0xf]
  %v877 = vld [vmem:[%s3] sm:$0x1]
  %v879 = vperm.slane %v877, 0
  %v889 = vunpack.c.l.b16 %v865
  %v890 = vunpack.c.l.b16 %v866
  %v891 = vunpack.c.l.b16 %v867
  %v892 = vunpack.c.l.b16 %v868
  %v893 = vunpack.c.l.b16 %v869
  %v894 = vunpack.c.l.b16 %v870
  %v895 = vunpack.c.l.b16 %v871
  %v896 = vunpack.c.l.b16 %v872
  %v897 = vpack.c.b16 %v890, %v889
  %v898 = vpack.c.b16 %v892, %v891
  %v899 = vpack.c.b16 %v894, %v893
  %v900 = vpack.c.b16 %v896, %v895
  %v905 = vunpack.c.l.b16 %v873
  %v906 = vunpack.c.l.b16 %v874
  %v907 = vunpack.c.l.b16 %v875
  %v908 = vunpack.c.l.b16 %v876
  %v909 = vpack.c.b16 %v906, %v905
  %v910 = vpack.c.b16 %v908, %v907
  %v914 = vsel %vm94, %v897, 0
  %v917 = vsel %vm94, %v898, 0
  %v920 = vsel %vm94, %v899, 0
  %v923 = vsel %vm94, %v900, 0
  %925 = vmatpush.bf16.msra.mxu0 0
  %926 = vmatpush.bf16.msra.mxu0 0
  %927 = vmatpush.bf16.msra.mxu0 0
  %928 = vmatpush.bf16.msra.mxu0 0
  %929 = vmatpush.bf16.msra.mxu0 0
  %930 = vmatpush.bf16.msra.mxu0 0
  %931 = vmatpush.bf16.msra.mxu0 %v910
  %932 = vmatpush.bf16.msra.mxu0 %v909
  %933 = vmatmul.bf16.gmra.mxu0 %v914
  %v934 = vpop.f32.mrf.mxu0
  %v935 = vadd.f32 %v879, %v934
  %v936 = vpop.f32.mrf.mxu0
  %v937 = vadd.f32 %v879, %v936
  %938 = vmatmul.bf16.gmra.mxu0 %v917
  %v939 = vpop.f32.mrf.mxu0
  %v940 = vadd.f32 %v879, %v939
  %v941 = vpop.f32.mrf.mxu0
  %v942 = vadd.f32 %v879, %v941
  %943 = vmatmul.bf16.gmra.mxu0 %v920
  %v944 = vpop.f32.mrf.mxu0
  %v945 = vadd.f32 %v879, %v944
  %v946 = vpop.f32.mrf.mxu0
  %v947 = vadd.f32 %v879, %v946
  %948 = vmatmul.bf16.gmra.mxu0 %v923
  %v949 = vpop.f32.mrf.mxu0
  %v950 = vadd.f32 %v879, %v949
  %v951 = vpop.f32.mrf.mxu0
  %v952 = vadd.f32 %v879, %v951
  %953 = vdwg.mxu0
  %v954 = vpack.c.bf16 %v935, %v935
  %v955 = vpack.c.bf16 %v937, %v937
  %v956 = vpack.c.bf16 %v940, %v940
  %v957 = vpack.c.bf16 %v942, %v942
  %v958 = vpack.c.bf16 %v945, %v945
  %v959 = vpack.c.bf16 %v947, %v947
  %v960 = vpack.c.bf16 %v950, %v950
  %v961 = vpack.c.bf16 %v952, %v952
  %962 = vst [vmem:[%s59] sm:$0xf] %v954
  %963 = vst [vmem:[%s59 + $0x4] sm:$0xf] %v955
  %964 = vst [vmem:[%s59 + $0x8] sm:$0xf] %v956
  %965 = vst [vmem:[%s59 + $0xc] sm:$0xf] %v957
  %966 = vst [vmem:[%s59 + $0x10] sm:$0xf] %v958
  %967 = vst [vmem:[%s59 + $0x14] sm:$0xf] %v959
  %968 = vst [vmem:[%s59 + $0x18] sm:$0xf] %v960
  %969 = vst [vmem:[%s59 + $0x1c] sm:$0xf] %v961
  %s970 = sadd.s32 0, 0
  %s971 = smul.u32 8, %s970
  %p972 = scmp.lt.s32.totalorder %s971, 7
  %s973 = scalar_select %p972, %s971, 7
  %s974 = smul.addr %s973, 4
  %s975 = scalar_lea.vmem %s7, %s974
  // Predicated region
  $region34: #{sxlstm_forward.1} parent=0 // pred_check
    _
  $region35: #{sxlstm_forward.1} parent=0 // pred_check_branch
    %977 = sbr.rel (0) target = $region37
  $region36: #{sxlstm_forward.1} parent=0 // pred_region
    %s978 = sadd.s32 0, 0
    %s979 = smul.u32 8, %s978
  $region37: #{sxlstm_forward.1} parent=0 // pred_fallthru
    _
  // Predicated region
  $region38: #{sxlstm_forward.1} parent=0 // pred_check
    _
  $region39: #{sxlstm_forward.1} parent=0 // pred_check_branch
    %981 = sbr.rel (0) target = $region41
  $region40: #{sxlstm_forward.1} parent=0 // pred_region
    %s982 = sadd.s32 0, 0
    %s983 = smul.u32 8, %s982
    %p984 = scmp.lt.s32.totalorder %s983, 7
    %s985 = scalar_select %p984, %s983, 7
    %s986 = smul.addr %s985, 4
    %s987 = scalar_lea.vmem %s7, %s986
  $region41: #{sxlstm_forward.1} parent=0 // pred_fallthru
    _

</llo_original>
